<compile_context>
chip_gen: v5e
topology: v5e:2x2
jax: 0.10.0
libtpu: 0.0.40
codegen_flags: <defaults>
</compile_context>

<pallas_src>
from functools import partial

import jax
import jax.numpy as jnp
from jax import lax
from jax.experimental import pallas as pl
from jax.experimental.pallas import tpu as pltpu


def _softmax_rows(s):
    # Row-wise softmax; one divide per row (reciprocal hoisted out of the broadcast).
    m = jnp.max(s, axis=-1, keepdims=True)
    e = jnp.exp(s - m)
    inv = 1.0 / jnp.sum(e, axis=-1, keepdims=True)
    return e * inv


def _colnorm(a):
    # torch F.normalize(x, dim=-1) on the transposed per-head view == L2-normalize
    # each (head, channel) column over the N tokens (axis 0) of the (N, C) slab.
    n = jnp.sqrt(jnp.sum(a * a, axis=0, keepdims=True))        # (1, C)
    inv = 1.0 / jnp.maximum(n, 1e-12)                          # C divides, not N*C
    return a * inv


def dca_kernel(x_ref, r_ref, wqkvv_ref, we_ref, wop_ref, vec_ref, mask_ref,
               out_ref, *, num_heads):
    bb, N, C = x_ref.shape
    H = num_heads
    d = C // H
    P = we_ref.shape[1]
    half = wop_ref.shape[1]
    f32 = jnp.float32

    # ---- packed parameters (all slices start at lane/sublane offset 0) ----
    wall = wqkvv_ref[...]               # (2C, 3C)
    wq_t = wall[:C, :C]                 # (C, C)
    wkvv_t = wall[C:, :]                # (C, 3C)
    wop_all = wop_ref[...]              # (2C, half)
    wop2_t = wop_all[:C, :]             # (C, half)  spatial out_proj2
    wop_t = wop_all[C:, :]              # (C, half)  channel out_proj
    vec = vec_ref[...]                  # (7, 3C)
    bq = vec[0:1, :C]
    bkvv = vec[1:2, :]
    be = vec[2:3, :P]
    bop2 = vec[3:4, :half]
    bop = vec[4:5, :half]
    t1 = vec[5:6, :C]                   # temperature  (channel), per column
    t2 = vec[6:7, :C]                   # temperature2 (spatial), per column
    masks = mask_ref[...]               # (C + H*N, C)
    maskc_add = masks[:C, :]            # (C, C)   additive 0 / -1e30 block-diag mask
    masks_mul = masks[C:, :]            # (H*N, C) multiplicative 0/1 head mask

    # ---- projections for all bb batch elements in two MXU pushes ----
    x2 = x_ref[...].reshape(bb * N, C)
    r2 = r_ref[...].reshape(bb * N, C)
    xq_all = jnp.dot(x2, wq_t, preferred_element_type=f32) + bq       # (bb*N, C)
    kvv_all = jnp.dot(r2, wkvv_t, preferred_element_type=f32) + bkvv  # (bb*N, 3C)

    outs = []
    for b in range(bb):                 # bb <= B (tiny); static unrolled loop
        sl = slice(b * N, (b + 1) * N)
        qn = _colnorm(xq_all[sl])                 # (N, C)
        kn = _colnorm(kvv_all[sl, :C])            # (N, C)
        vca = kvv_all[sl, C:2 * C]                # (N, C)
        vsa = kvv_all[sl, 2 * C:]                 # (N, C)

        # ---------- channel attention (all heads in one (C,C) matmul) ----------
        m_ca = lax.dot_general(qn * t1, kn, (((0,), (0,)), ((), ())),
                               preferred_element_type=f32) + maskc_add  # (C, C)
        a_ca = _softmax_rows(m_ca)                                       # block-diag
        x_ca = lax.dot_general(vca, a_ca, (((1,), (1,)), ((), ())),
                               preferred_element_type=f32)               # (N, C)
        out_ca = jnp.dot(x_ca, wop_t, preferred_element_type=f32) + bop  # (N, half)

        # ---------- spatial attention (all heads, fused E/F projection) --------
        kvp = lax.dot_general(jnp.concatenate([kn, vsa], axis=1), we_ref[...],
                              (((0,), (0,)), ((), ())),
                              preferred_element_type=f32) + be           # (2C, P)
        kp, vp = kvp[:C], kvp[C:]

        q_bd = jnp.tile(qn * t2, (H, 1)) * masks_mul                     # (H*N, C)
        s_sa = jnp.dot(q_bd, kp, preferred_element_type=f32)             # (H*N, P)
        a_sa = _softmax_rows(s_sa)
        g = lax.dot_general(a_sa, vp, (((1,), (1,)), ((), ())),
                            preferred_element_type=f32)                  # (H*N, C)
        gm = g * masks_mul

        if d == N:
            # permute(0,3,1,2).reshape(B,N,C) + out_proj2 folded into one masked
            # contraction and a per-head-block sublane sum (no activation transposes).
            tmp = lax.dot_general(gm, wop2_t, (((0,), (0,)), ((), ())),
                                  preferred_element_type=f32)            # (C, half)
            out_sa = jnp.sum(tmp.reshape(H, d, half), axis=0) + bop2     # (N, half)
        else:
            # TODO(synk): general d != N fallback — materializes the torch
            # head-mixing reshape; not exercised by the bundled test shapes.
            sel = (lax.broadcasted_iota(jnp.int32, (C, d), 0) % d ==
                   lax.broadcasted_iota(jnp.int32, (C, d), 1)).astype(f32)
            x_sa_t = lax.dot_general(sel, gm, (((0,), (1,)), ((), ())),
                                     preferred_element_type=f32)         # (d, H*N)
            out_sa = jnp.dot(x_sa_t.reshape(N, C), wop2_t,
                             preferred_element_type=f32) + bop2          # (N, half)

        outs.append(jnp.concatenate([out_sa, out_ca], axis=-1))          # (N, C)

    out_ref[...] = jnp.stack(outs, axis=0).astype(out_ref.dtype)         # one store


def _num_tensorcores():
    # v7x packs 2 TensorCores per chip -> keep one batch element per core there.
    # v5e/v6e (and unknown backends) are single-TC -> fold the batch instead.
    try:
        kind = jax.devices()[0].device_kind.lower()
    except Exception:
        return 1
    return 2 if ('tpu' in kind and '7' in kind) else 1


def dca_forward(x, ref, params, num_heads):
    B, N, C = x.shape
    H = num_heads
    d = C // H
    half = params['wop'].shape[0]
    P = params['we'].shape[0]
    f32 = jnp.float32

    # --- weights pre-transposed to (in, out) and packed: no in-kernel transposes ---
    wq_t = params['wq'].T.astype(f32)                          # (C, C)
    wkvv_t = params['wkvv'].T.astype(f32)                      # (C, 3C)
    wqkvv = jnp.zeros((2 * C, 3 * C), f32)
    wqkvv = wqkvv.at[:C, :C].set(wq_t).at[C:, :].set(wkvv_t)   # (2C, 3C)
    we_t = params['we'].T.astype(f32)                          # (N, P)
    wop_both = jnp.concatenate([params['wop2'].T, params['wop'].T],
                               axis=0).astype(f32)             # (2C, half)

    # --- pack the 7 small bias / temperature vectors into one (7, 3C) slab ---
    W = 3 * C

    def row(v):
        v = jnp.asarray(v, f32).reshape(-1)
        return jnp.zeros((W,), f32).at[:v.shape[0]].set(v)

    t1_row = jnp.repeat(params['temp'].reshape(-1).astype(f32), d)
    t2_row = jnp.repeat(params['temp2'].reshape(-1).astype(f32), d)
    vec = jnp.stack([row(params['bq']), row(params['bkvv']), row(params['be']),
                     row(params['bop2']), row(params['bop']),
                     row(t1_row), row(t2_row)], axis=0)        # (7, 3C)

    # --- grid-invariant block-diagonal head masks, built once in the wrapper ---
    cidx = jnp.arange(C) // d
    maskc_add = jnp.where(cidx[:, None] == cidx[None, :], 0.0, -1e30).astype(f32)
    masks_mul = ((jnp.arange(H * N)[:, None] // N) == cidx[None, :]).astype(f32)
    mask_pack = jnp.concatenate([maskc_add, masks_mul], axis=0)  # (C + H*N, C)

    # --- batch folding: all B in one step on single-TC chips, split on v7x ---
    num_tc = _num_tensorcores()
    if num_tc > 1:
        bb = B // num_tc if B % num_tc == 0 else 1
    else:
        bb = B
    bb = max(bb, 1)
    steps = B // bb

    def full(shape):
        n = len(shape)
        return pl.BlockSpec(shape, lambda b, _n=n: (0,) * _n)

    kernel = partial(dca_kernel, num_heads=H)
    return pl.pallas_call(
        kernel,
        out_shape=jax.ShapeDtypeStruct((B, N, C), f32),
        grid=(steps,),
        in_specs=[
            pl.BlockSpec((bb, N, C), lambda b: (b, 0, 0)),     # x
            pl.BlockSpec((bb, N, C), lambda b: (b, 0, 0)),     # ref
            full(wqkvv.shape),                                 # wq + wkvv pack
            full(we_t.shape),                                  # E/F weight
            full(wop_both.shape),                              # out_proj2 + out_proj
            full(vec.shape),                                   # biases + temperatures
            full(mask_pack.shape),                             # head masks
        ],
        out_specs=pl.BlockSpec((bb, N, C), lambda b: (b, 0, 0)),
        compiler_params=pltpu.CompilerParams(
            dimension_semantics=("parallel",)),
    )(x.astype(f32), ref.astype(f32), wqkvv, we_t, wop_both, vec, mask_pack)


def dca_reference(x, ref, params, H):
    """Pure-JAX mirror of the PyTorch forward (eval mode), for verification."""
    B, N, C = x.shape
    d = C // H
    xq = x @ params['wq'].T + params['bq']
    q = xq.reshape(B, N, H, d).transpose(0, 2, 1, 3)                       # (B,H,N,d)
    kvv = ref @ params['wkvv'].T + params['bkvv']
    kvv = kvv.reshape(B, N, 3, H, d).transpose(2, 0, 3, 1, 4)              # (3,B,H,N,d)
    k, v_ca, v_sa = kvv[0], kvv[1], kvv[2]
    q = jnp.swapaxes(q, -2, -1)
    k = jnp.swapaxes(k, -2, -1)
    v_ca = jnp.swapaxes(v_ca, -2, -1)
    v_sa = jnp.swapaxes(v_sa, -2, -1)
    q = q / jnp.maximum(jnp.linalg.norm(q, axis=-1, keepdims=True), 1e-12)
    k = k / jnp.maximum(jnp.linalg.norm(k, axis=-1, keepdims=True), 1e-12)
    attn_ca = jnp.einsum('bhdn,bhen->bhde', q, k) * params['temp']
    attn_ca = jax.nn.softmax(attn_ca, -1)
    x_ca = jnp.einsum('bhde,bhen->bhdn', attn_ca, v_ca)
    x_ca = x_ca.transpose(0, 3, 1, 2).reshape(B, N, C)
    k_proj = k @ params['we'].T + params['be']
    v_proj = v_sa @ params['we'].T + params['be']
    attn_sa = jnp.einsum('bhdn,bhdp->bhnp', q, k_proj) * params['temp2']
    attn_sa = jax.nn.softmax(attn_sa, -1)
    x_sa = jnp.einsum('bhnp,bhdp->bhnd', attn_sa, v_proj)
    x_sa = x_sa.transpose(0, 3, 1, 2).reshape(B, N, C)
    x_ca = x_ca @ params['wop'].T + params['bop']
    x_sa = x_sa @ params['wop2'].T + params['bop2']
    return jnp.concatenate([x_sa, x_ca], axis=-1)


if __name__ == "__main__":
    # hidden_size = C = 32, num_heads = 4, input_size1 = N = 8, proj_size = 4
    B, N, C, H, P = 2, 8, 32, 4, 4

    key = jax.random.PRNGKey(0)
    keys = jax.random.split(key, 12)

    def init(k, shape, scale=0.1):
        return jax.random.normal(k, shape, jnp.float32) * scale

    params = {
        'wq':   init(keys[0], (C, C)),        'bq':   init(keys[1], (C,)),
        'wkvv': init(keys[2], (3 * C, C)),    'bkvv': init(keys[3], (3 * C,)),
        'we':   init(keys[4], (P, N)),        'be':   init(keys[5], (P,)),
        'wop':  init(keys[6], (C // 2, C)),   'bop':  init(keys[7], (C // 2,)),
        'wop2': init(keys[8], (C // 2, C)),   'bop2': init(keys[9], (C // 2,)),
        'temp':  jnp.ones((H, 1, 1), jnp.float32),   # nn.Parameter(torch.ones(H,1,1))
        'temp2': jnp.ones((H, 1, 1), jnp.float32),
    }

    x = jax.random.normal(keys[10], (B, N, C), jnp.float32)
    ref = jax.random.normal(keys[11], (B, N, C), jnp.float32)

    out = dca_forward(x, ref, params, H)
    out = jax.block_until_ready(out)

    expected = dca_reference(x, ref, params, H)
    assert out.shape == (B, N, C)
    assert jnp.allclose(out, expected, atol=1e-4, rtol=1e-4), \
        float(jnp.max(jnp.abs(out - expected)))

    print("KERNEL_OK")
</pallas_src>

<mosaic_0001>
module attributes {stable_mosaic.version = 11 : i64} {
  func.func @dca_kernel(%arg0: i32, %arg1: memref<2x8x32xf32, #tpu.memory_space<vmem>>, %arg2: memref<2x8x32xf32, #tpu.memory_space<vmem>>, %arg3: memref<64x96xf32, #tpu.memory_space<vmem>>, %arg4: memref<8x4xf32, #tpu.memory_space<vmem>>, %arg5: memref<64x16xf32, #tpu.memory_space<vmem>>, %arg6: memref<7x96xf32, #tpu.memory_space<vmem>>, %arg7: memref<64x32xf32, #tpu.memory_space<vmem>>, %arg8: memref<2x8x32xf32, #tpu.memory_space<vmem>>) attributes {dimension_semantics = [#tpu.dimension_semantics<parallel>], iteration_bounds = array<i64: 1>, scalar_prefetch = 0 : i64, scratch_operands = 0 : i64, tpu.core_type = #tpu.core_type<tc>, window_params = [{transform_indices = @transform_0, window_bounds = array<i64: 2, 8, 32>}, {transform_indices = @transform_1, window_bounds = array<i64: 2, 8, 32>}, {pipeline_mode = #tpu.pipeline_mode<synchronous>, transform_indices = @transform_2, window_bounds = array<i64: 64, 96>}, {pipeline_mode = #tpu.pipeline_mode<synchronous>, transform_indices = @transform_3, window_bounds = array<i64: 8, 4>}, {pipeline_mode = #tpu.pipeline_mode<synchronous>, transform_indices = @transform_4, window_bounds = array<i64: 64, 16>}, {pipeline_mode = #tpu.pipeline_mode<synchronous>, transform_indices = @transform_5, window_bounds = array<i64: 7, 96>}, {pipeline_mode = #tpu.pipeline_mode<synchronous>, transform_indices = @transform_6, window_bounds = array<i64: 64, 32>}, {transform_indices = @transform_7, window_bounds = array<i64: 2, 8, 32>}]} {
    %c0 = arith.constant 0 : index
    %c0_0 = arith.constant 0 : index
    %0 = vector.load %arg3[%c0, %c0_0] : memref<64x96xf32, #tpu.memory_space<vmem>>, vector<64x96xf32>
    %1 = vector.extract_strided_slice %0 {offsets = [0, 0], sizes = [32, 32], strides = [1, 1]} : vector<64x96xf32> to vector<32x32xf32>
    %2 = vector.extract_strided_slice %0 {offsets = [32, 0], sizes = [32, 96], strides = [1, 1]} : vector<64x96xf32> to vector<32x96xf32>
    %c0_1 = arith.constant 0 : index
    %c0_2 = arith.constant 0 : index
    %3 = vector.load %arg5[%c0_1, %c0_2] : memref<64x16xf32, #tpu.memory_space<vmem>>, vector<64x16xf32>
    %4 = vector.extract_strided_slice %3 {offsets = [0, 0], sizes = [32, 16], strides = [1, 1]} : vector<64x16xf32> to vector<32x16xf32>
    %5 = vector.extract_strided_slice %3 {offsets = [32, 0], sizes = [32, 16], strides = [1, 1]} : vector<64x16xf32> to vector<32x16xf32>
    %c0_3 = arith.constant 0 : index
    %c0_4 = arith.constant 0 : index
    %6 = vector.load %arg6[%c0_3, %c0_4] : memref<7x96xf32, #tpu.memory_space<vmem>>, vector<7x96xf32>
    %7 = vector.extract_strided_slice %6 {offsets = [0, 0], sizes = [1, 32], strides = [1, 1]} : vector<7x96xf32> to vector<1x32xf32>
    %8 = vector.extract_strided_slice %6 {offsets = [1, 0], sizes = [1, 96], strides = [1, 1]} : vector<7x96xf32> to vector<1x96xf32>
    %9 = vector.extract_strided_slice %6 {offsets = [2, 0], sizes = [1, 4], strides = [1, 1]} : vector<7x96xf32> to vector<1x4xf32>
    %10 = vector.extract_strided_slice %6 {offsets = [3, 0], sizes = [1, 16], strides = [1, 1]} : vector<7x96xf32> to vector<1x16xf32>
    %11 = vector.extract_strided_slice %6 {offsets = [4, 0], sizes = [1, 16], strides = [1, 1]} : vector<7x96xf32> to vector<1x16xf32>
    %12 = vector.extract_strided_slice %6 {offsets = [5, 0], sizes = [1, 32], strides = [1, 1]} : vector<7x96xf32> to vector<1x32xf32>
    %13 = vector.extract_strided_slice %6 {offsets = [6, 0], sizes = [1, 32], strides = [1, 1]} : vector<7x96xf32> to vector<1x32xf32>
    %c0_5 = arith.constant 0 : index
    %c0_6 = arith.constant 0 : index
    %14 = vector.load %arg7[%c0_5, %c0_6] : memref<64x32xf32, #tpu.memory_space<vmem>>, vector<64x32xf32>
    %15 = vector.extract_strided_slice %14 {offsets = [0, 0], sizes = [32, 32], strides = [1, 1]} : vector<64x32xf32> to vector<32x32xf32>
    %16 = vector.extract_strided_slice %14 {offsets = [32, 0], sizes = [32, 32], strides = [1, 1]} : vector<64x32xf32> to vector<32x32xf32>
    %c0_7 = arith.constant 0 : index
    %c0_8 = arith.constant 0 : index
    %c0_9 = arith.constant 0 : index
    %17 = vector.load %arg1[%c0_7, %c0_8, %c0_9] : memref<2x8x32xf32, #tpu.memory_space<vmem>>, vector<2x8x32xf32>
    %18 = vector.shape_cast %17 : vector<2x8x32xf32> to vector<16x32xf32>
    %c0_10 = arith.constant 0 : index
    %c0_11 = arith.constant 0 : index
    %c0_12 = arith.constant 0 : index
    %19 = vector.load %arg2[%c0_10, %c0_11, %c0_12] : memref<2x8x32xf32, #tpu.memory_space<vmem>>, vector<2x8x32xf32>
    %20 = vector.shape_cast %19 : vector<2x8x32xf32> to vector<16x32xf32>
    %cst = arith.constant dense<0.000000e+00> : vector<16x32xf32>
    %21 = tpu.matmul %18, %1, %cst {dimension_numbers = #tpu.dot_dimension_numbers<[1], [0], [0], [1], [0, 0, 1, 1], [], []>} : vector<16x32xf32>, vector<32x32xf32>, vector<16x32xf32> -> vector<16x32xf32>
    %22 = vector.broadcast %7 : vector<1x32xf32> to vector<16x32xf32>
    %23 = arith.addf %21, %22 : vector<16x32xf32>
    %cst_13 = arith.constant dense<0.000000e+00> : vector<16x96xf32>
    %24 = tpu.matmul %20, %2, %cst_13 {dimension_numbers = #tpu.dot_dimension_numbers<[1], [0], [0], [1], [0, 0, 1, 1], [], []>} : vector<16x32xf32>, vector<32x96xf32>, vector<16x96xf32> -> vector<16x96xf32>
    %25 = vector.broadcast %8 : vector<1x96xf32> to vector<16x96xf32>
    %26 = arith.addf %24, %25 : vector<16x96xf32>
    %27 = vector.extract_strided_slice %23 {offsets = [0, 0], sizes = [8, 32], strides = [1, 1]} : vector<16x32xf32> to vector<8x32xf32>
    %28 = arith.mulf %27, %27 : vector<8x32xf32>
    %cst_14 = arith.constant dense<0.000000e+00> : vector<32xf32>
    %29 = vector.multi_reduction <add>, %28, %cst_14 [0] : vector<8x32xf32> to vector<32xf32>
    %30 = vector.shape_cast %29 : vector<32xf32> to vector<1x32xf32>
    %31 = math.sqrt %30 : vector<1x32xf32>
    %cst_15 = arith.constant 9.99999996E-13 : f32
    %32 = vector.broadcast %cst_15 : f32 to vector<1x32xf32>
    %33 = arith.maximumf %31, %32 : vector<1x32xf32>
    %cst_16 = arith.constant 1.000000e+00 : f32
    %34 = vector.broadcast %cst_16 : f32 to vector<1x32xf32>
    %35 = arith.divf %34, %33 : vector<1x32xf32>
    %36 = vector.broadcast %35 : vector<1x32xf32> to vector<8x32xf32>
    %37 = arith.mulf %27, %36 : vector<8x32xf32>
    %38 = vector.extract_strided_slice %26 {offsets = [0, 0], sizes = [8, 32], strides = [1, 1]} : vector<16x96xf32> to vector<8x32xf32>
    %39 = arith.mulf %38, %38 : vector<8x32xf32>
    %cst_17 = arith.constant dense<0.000000e+00> : vector<32xf32>
    %40 = vector.multi_reduction <add>, %39, %cst_17 [0] : vector<8x32xf32> to vector<32xf32>
    %41 = vector.shape_cast %40 : vector<32xf32> to vector<1x32xf32>
    %42 = math.sqrt %41 : vector<1x32xf32>
    %cst_18 = arith.constant 9.99999996E-13 : f32
    %43 = vector.broadcast %cst_18 : f32 to vector<1x32xf32>
    %44 = arith.maximumf %42, %43 : vector<1x32xf32>
    %cst_19 = arith.constant 1.000000e+00 : f32
    %45 = vector.broadcast %cst_19 : f32 to vector<1x32xf32>
    %46 = arith.divf %45, %44 : vector<1x32xf32>
    %47 = vector.broadcast %46 : vector<1x32xf32> to vector<8x32xf32>
    %48 = arith.mulf %38, %47 : vector<8x32xf32>
    %49 = vector.extract_strided_slice %26 {offsets = [0, 32], sizes = [8, 32], strides = [1, 1]} : vector<16x96xf32> to vector<8x32xf32>
    %50 = vector.extract_strided_slice %26 {offsets = [0, 64], sizes = [8, 32], strides = [1, 1]} : vector<16x96xf32> to vector<8x32xf32>
    %51 = vector.broadcast %12 : vector<1x32xf32> to vector<8x32xf32>
    %52 = arith.mulf %37, %51 : vector<8x32xf32>
    %cst_20 = arith.constant dense<0.000000e+00> : vector<32x32xf32>
    %53 = tpu.matmul %52, %48, %cst_20 {dimension_numbers = #tpu.dot_dimension_numbers<[0], [0], [1], [1], [0, 1, 1, 1], [], []>} : vector<8x32xf32>, vector<8x32xf32>, vector<32x32xf32> -> vector<32x32xf32>
    %54 = arith.addf %53, %15 : vector<32x32xf32>
    %cst_21 = arith.constant dense<0xFF800000> : vector<32xf32>
    %55 = vector.multi_reduction <maximumf>, %54, %cst_21 [1] : vector<32x32xf32> to vector<32xf32>
    %56 = vector.shape_cast %55 : vector<32xf32> to vector<32x1xf32>
    %57 = vector.broadcast %56 : vector<32x1xf32> to vector<32x32xf32>
    %58 = arith.subf %54, %57 : vector<32x32xf32>
    %59 = math.exp %58 : vector<32x32xf32>
    %cst_22 = arith.constant dense<0.000000e+00> : vector<32xf32>
    %60 = vector.multi_reduction <add>, %59, %cst_22 [1] : vector<32x32xf32> to vector<32xf32>
    %61 = vector.shape_cast %60 : vector<32xf32> to vector<32x1xf32>
    %cst_23 = arith.constant 1.000000e+00 : f32
    %62 = vector.broadcast %cst_23 : f32 to vector<32x1xf32>
    %63 = arith.divf %62, %61 : vector<32x1xf32>
    %64 = vector.broadcast %63 : vector<32x1xf32> to vector<32x32xf32>
    %65 = arith.mulf %59, %64 : vector<32x32xf32>
    %cst_24 = arith.constant dense<0.000000e+00> : vector<8x32xf32>
    %66 = tpu.matmul %49, %65, %cst_24 {dimension_numbers = #tpu.dot_dimension_numbers<[1], [1], [0], [0], [0, 0, 1, 0], [], []>} : vector<8x32xf32>, vector<32x32xf32>, vector<8x32xf32> -> vector<8x32xf32>
    %cst_25 = arith.constant dense<0.000000e+00> : vector<8x16xf32>
    %67 = tpu.matmul %66, %5, %cst_25 {dimension_numbers = #tpu.dot_dimension_numbers<[1], [0], [0], [1], [0, 0, 1, 1], [], []>} : vector<8x32xf32>, vector<32x16xf32>, vector<8x16xf32> -> vector<8x16xf32>
    %68 = vector.broadcast %11 : vector<1x16xf32> to vector<8x16xf32>
    %69 = arith.addf %67, %68 : vector<8x16xf32>
    %70 = tpu.concatenate %48, %50 in 1 : vector<8x32xf32>, vector<8x32xf32> -> vector<8x64xf32>
    %c0_26 = arith.constant 0 : index
    %c0_27 = arith.constant 0 : index
    %71 = vector.load %arg4[%c0_26, %c0_27] : memref<8x4xf32, #tpu.memory_space<vmem>>, vector<8x4xf32>
    %cst_28 = arith.constant dense<0.000000e+00> : vector<64x4xf32>
    %72 = tpu.matmul %70, %71, %cst_28 {dimension_numbers = #tpu.dot_dimension_numbers<[0], [0], [1], [1], [0, 1, 1, 1], [], []>} : vector<8x64xf32>, vector<8x4xf32>, vector<64x4xf32> -> vector<64x4xf32>
    %73 = vector.broadcast %9 : vector<1x4xf32> to vector<64x4xf32>
    %74 = arith.addf %72, %73 : vector<64x4xf32>
    %75 = vector.extract_strided_slice %74 {offsets = [0, 0], sizes = [32, 4], strides = [1, 1]} : vector<64x4xf32> to vector<32x4xf32>
    %76 = vector.extract_strided_slice %74 {offsets = [32, 0], sizes = [32, 4], strides = [1, 1]} : vector<64x4xf32> to vector<32x4xf32>
    %77 = vector.broadcast %13 : vector<1x32xf32> to vector<8x32xf32>
    %78 = arith.mulf %37, %77 : vector<8x32xf32>
    %79 = tpu.concatenate %78, %78, %78, %78 in 0 : vector<8x32xf32>, vector<8x32xf32>, vector<8x32xf32>, vector<8x32xf32> -> vector<32x32xf32>
    %80 = arith.mulf %79, %16 : vector<32x32xf32>
    %cst_29 = arith.constant dense<0.000000e+00> : vector<32x4xf32>
    %81 = tpu.matmul %80, %75, %cst_29 {dimension_numbers = #tpu.dot_dimension_numbers<[1], [0], [0], [1], [0, 0, 1, 1], [], []>} : vector<32x32xf32>, vector<32x4xf32>, vector<32x4xf32> -> vector<32x4xf32>
    %cst_30 = arith.constant dense<0xFF800000> : vector<32xf32>
    %82 = vector.multi_reduction <maximumf>, %81, %cst_30 [1] : vector<32x4xf32> to vector<32xf32>
    %83 = vector.shape_cast %82 : vector<32xf32> to vector<32x1xf32>
    %84 = vector.broadcast %83 : vector<32x1xf32> to vector<32x4xf32>
    %85 = arith.subf %81, %84 : vector<32x4xf32>
    %86 = math.exp %85 : vector<32x4xf32>
    %cst_31 = arith.constant dense<0.000000e+00> : vector<32xf32>
    %87 = vector.multi_reduction <add>, %86, %cst_31 [1] : vector<32x4xf32> to vector<32xf32>
    %88 = vector.shape_cast %87 : vector<32xf32> to vector<32x1xf32>
    %cst_32 = arith.constant 1.000000e+00 : f32
    %89 = vector.broadcast %cst_32 : f32 to vector<32x1xf32>
    %90 = arith.divf %89, %88 : vector<32x1xf32>
    %91 = vector.broadcast %90 : vector<32x1xf32> to vector<32x4xf32>
    %92 = arith.mulf %86, %91 : vector<32x4xf32>
    %cst_33 = arith.constant dense<0.000000e+00> : vector<32x32xf32>
    %93 = tpu.matmul %92, %76, %cst_33 {dimension_numbers = #tpu.dot_dimension_numbers<[1], [1], [0], [0], [0, 0, 1, 0], [], []>} : vector<32x4xf32>, vector<32x4xf32>, vector<32x32xf32> -> vector<32x32xf32>
    %94 = arith.mulf %93, %16 : vector<32x32xf32>
    %cst_34 = arith.constant dense<0.000000e+00> : vector<32x16xf32>
    %95 = tpu.matmul %94, %4, %cst_34 {dimension_numbers = #tpu.dot_dimension_numbers<[0], [0], [1], [1], [0, 1, 1, 1], [], []>} : vector<32x32xf32>, vector<32x16xf32>, vector<32x16xf32> -> vector<32x16xf32>
    %96 = vector.shape_cast %95 : vector<32x16xf32> to vector<4x8x16xf32>
    %cst_35 = arith.constant dense<0.000000e+00> : vector<8x16xf32>
    %97 = vector.multi_reduction <add>, %96, %cst_35 [0] : vector<4x8x16xf32> to vector<8x16xf32>
    %98 = vector.broadcast %10 : vector<1x16xf32> to vector<8x16xf32>
    %99 = arith.addf %97, %98 : vector<8x16xf32>
    %100 = tpu.concatenate %99, %69 in 1 : vector<8x16xf32>, vector<8x16xf32> -> vector<8x32xf32>
    %101 = vector.extract_strided_slice %23 {offsets = [8, 0], sizes = [8, 32], strides = [1, 1]} : vector<16x32xf32> to vector<8x32xf32>
    %102 = arith.mulf %101, %101 : vector<8x32xf32>
    %cst_36 = arith.constant dense<0.000000e+00> : vector<32xf32>
    %103 = vector.multi_reduction <add>, %102, %cst_36 [0] : vector<8x32xf32> to vector<32xf32>
    %104 = vector.shape_cast %103 : vector<32xf32> to vector<1x32xf32>
    %105 = math.sqrt %104 : vector<1x32xf32>
    %cst_37 = arith.constant 9.99999996E-13 : f32
    %106 = vector.broadcast %cst_37 : f32 to vector<1x32xf32>
    %107 = arith.maximumf %105, %106 : vector<1x32xf32>
    %cst_38 = arith.constant 1.000000e+00 : f32
    %108 = vector.broadcast %cst_38 : f32 to vector<1x32xf32>
    %109 = arith.divf %108, %107 : vector<1x32xf32>
    %110 = vector.broadcast %109 : vector<1x32xf32> to vector<8x32xf32>
    %111 = arith.mulf %101, %110 : vector<8x32xf32>
    %112 = vector.extract_strided_slice %26 {offsets = [8, 0], sizes = [8, 32], strides = [1, 1]} : vector<16x96xf32> to vector<8x32xf32>
    %113 = arith.mulf %112, %112 : vector<8x32xf32>
    %cst_39 = arith.constant dense<0.000000e+00> : vector<32xf32>
    %114 = vector.multi_reduction <add>, %113, %cst_39 [0] : vector<8x32xf32> to vector<32xf32>
    %115 = vector.shape_cast %114 : vector<32xf32> to vector<1x32xf32>
    %116 = math.sqrt %115 : vector<1x32xf32>
    %cst_40 = arith.constant 9.99999996E-13 : f32
    %117 = vector.broadcast %cst_40 : f32 to vector<1x32xf32>
    %118 = arith.maximumf %116, %117 : vector<1x32xf32>
    %cst_41 = arith.constant 1.000000e+00 : f32
    %119 = vector.broadcast %cst_41 : f32 to vector<1x32xf32>
    %120 = arith.divf %119, %118 : vector<1x32xf32>
    %121 = vector.broadcast %120 : vector<1x32xf32> to vector<8x32xf32>
    %122 = arith.mulf %112, %121 : vector<8x32xf32>
    %123 = vector.extract_strided_slice %26 {offsets = [8, 32], sizes = [8, 32], strides = [1, 1]} : vector<16x96xf32> to vector<8x32xf32>
    %124 = vector.extract_strided_slice %26 {offsets = [8, 64], sizes = [8, 32], strides = [1, 1]} : vector<16x96xf32> to vector<8x32xf32>
    %125 = vector.broadcast %12 : vector<1x32xf32> to vector<8x32xf32>
    %126 = arith.mulf %111, %125 : vector<8x32xf32>
    %cst_42 = arith.constant dense<0.000000e+00> : vector<32x32xf32>
    %127 = tpu.matmul %126, %122, %cst_42 {dimension_numbers = #tpu.dot_dimension_numbers<[0], [0], [1], [1], [0, 1, 1, 1], [], []>} : vector<8x32xf32>, vector<8x32xf32>, vector<32x32xf32> -> vector<32x32xf32>
    %128 = arith.addf %127, %15 : vector<32x32xf32>
    %cst_43 = arith.constant dense<0xFF800000> : vector<32xf32>
    %129 = vector.multi_reduction <maximumf>, %128, %cst_43 [1] : vector<32x32xf32> to vector<32xf32>
    %130 = vector.shape_cast %129 : vector<32xf32> to vector<32x1xf32>
    %131 = vector.broadcast %130 : vector<32x1xf32> to vector<32x32xf32>
    %132 = arith.subf %128, %131 : vector<32x32xf32>
    %133 = math.exp %132 : vector<32x32xf32>
    %cst_44 = arith.constant dense<0.000000e+00> : vector<32xf32>
    %134 = vector.multi_reduction <add>, %133, %cst_44 [1] : vector<32x32xf32> to vector<32xf32>
    %135 = vector.shape_cast %134 : vector<32xf32> to vector<32x1xf32>
    %cst_45 = arith.constant 1.000000e+00 : f32
    %136 = vector.broadcast %cst_45 : f32 to vector<32x1xf32>
    %137 = arith.divf %136, %135 : vector<32x1xf32>
    %138 = vector.broadcast %137 : vector<32x1xf32> to vector<32x32xf32>
    %139 = arith.mulf %133, %138 : vector<32x32xf32>
    %cst_46 = arith.constant dense<0.000000e+00> : vector<8x32xf32>
    %140 = tpu.matmul %123, %139, %cst_46 {dimension_numbers = #tpu.dot_dimension_numbers<[1], [1], [0], [0], [0, 0, 1, 0], [], []>} : vector<8x32xf32>, vector<32x32xf32>, vector<8x32xf32> -> vector<8x32xf32>
    %cst_47 = arith.constant dense<0.000000e+00> : vector<8x16xf32>
    %141 = tpu.matmul %140, %5, %cst_47 {dimension_numbers = #tpu.dot_dimension_numbers<[1], [0], [0], [1], [0, 0, 1, 1], [], []>} : vector<8x32xf32>, vector<32x16xf32>, vector<8x16xf32> -> vector<8x16xf32>
    %142 = vector.broadcast %11 : vector<1x16xf32> to vector<8x16xf32>
    %143 = arith.addf %141, %142 : vector<8x16xf32>
    %144 = tpu.concatenate %122, %124 in 1 : vector<8x32xf32>, vector<8x32xf32> -> vector<8x64xf32>
    %c0_48 = arith.constant 0 : index
    %c0_49 = arith.constant 0 : index
    %145 = vector.load %arg4[%c0_48, %c0_49] : memref<8x4xf32, #tpu.memory_space<vmem>>, vector<8x4xf32>
    %cst_50 = arith.constant dense<0.000000e+00> : vector<64x4xf32>
    %146 = tpu.matmul %144, %145, %cst_50 {dimension_numbers = #tpu.dot_dimension_numbers<[0], [0], [1], [1], [0, 1, 1, 1], [], []>} : vector<8x64xf32>, vector<8x4xf32>, vector<64x4xf32> -> vector<64x4xf32>
    %147 = vector.broadcast %9 : vector<1x4xf32> to vector<64x4xf32>
    %148 = arith.addf %146, %147 : vector<64x4xf32>
    %149 = vector.extract_strided_slice %148 {offsets = [0, 0], sizes = [32, 4], strides = [1, 1]} : vector<64x4xf32> to vector<32x4xf32>
    %150 = vector.extract_strided_slice %148 {offsets = [32, 0], sizes = [32, 4], strides = [1, 1]} : vector<64x4xf32> to vector<32x4xf32>
    %151 = vector.broadcast %13 : vector<1x32xf32> to vector<8x32xf32>
    %152 = arith.mulf %111, %151 : vector<8x32xf32>
    %153 = tpu.concatenate %152, %152, %152, %152 in 0 : vector<8x32xf32>, vector<8x32xf32>, vector<8x32xf32>, vector<8x32xf32> -> vector<32x32xf32>
    %154 = arith.mulf %153, %16 : vector<32x32xf32>
    %cst_51 = arith.constant dense<0.000000e+00> : vector<32x4xf32>
    %155 = tpu.matmul %154, %149, %cst_51 {dimension_numbers = #tpu.dot_dimension_numbers<[1], [0], [0], [1], [0, 0, 1, 1], [], []>} : vector<32x32xf32>, vector<32x4xf32>, vector<32x4xf32> -> vector<32x4xf32>
    %cst_52 = arith.constant dense<0xFF800000> : vector<32xf32>
    %156 = vector.multi_reduction <maximumf>, %155, %cst_52 [1] : vector<32x4xf32> to vector<32xf32>
    %157 = vector.shape_cast %156 : vector<32xf32> to vector<32x1xf32>
    %158 = vector.broadcast %157 : vector<32x1xf32> to vector<32x4xf32>
    %159 = arith.subf %155, %158 : vector<32x4xf32>
    %160 = math.exp %159 : vector<32x4xf32>
    %cst_53 = arith.constant dense<0.000000e+00> : vector<32xf32>
    %161 = vector.multi_reduction <add>, %160, %cst_53 [1] : vector<32x4xf32> to vector<32xf32>
    %162 = vector.shape_cast %161 : vector<32xf32> to vector<32x1xf32>
    %cst_54 = arith.constant 1.000000e+00 : f32
    %163 = vector.broadcast %cst_54 : f32 to vector<32x1xf32>
    %164 = arith.divf %163, %162 : vector<32x1xf32>
    %165 = vector.broadcast %164 : vector<32x1xf32> to vector<32x4xf32>
    %166 = arith.mulf %160, %165 : vector<32x4xf32>
    %cst_55 = arith.constant dense<0.000000e+00> : vector<32x32xf32>
    %167 = tpu.matmul %166, %150, %cst_55 {dimension_numbers = #tpu.dot_dimension_numbers<[1], [1], [0], [0], [0, 0, 1, 0], [], []>} : vector<32x4xf32>, vector<32x4xf32>, vector<32x32xf32> -> vector<32x32xf32>
    %168 = arith.mulf %167, %16 : vector<32x32xf32>
    %cst_56 = arith.constant dense<0.000000e+00> : vector<32x16xf32>
    %169 = tpu.matmul %168, %4, %cst_56 {dimension_numbers = #tpu.dot_dimension_numbers<[0], [0], [1], [1], [0, 1, 1, 1], [], []>} : vector<32x32xf32>, vector<32x16xf32>, vector<32x16xf32> -> vector<32x16xf32>
    %170 = vector.shape_cast %169 : vector<32x16xf32> to vector<4x8x16xf32>
    %cst_57 = arith.constant dense<0.000000e+00> : vector<8x16xf32>
    %171 = vector.multi_reduction <add>, %170, %cst_57 [0] : vector<4x8x16xf32> to vector<8x16xf32>
    %172 = vector.broadcast %10 : vector<1x16xf32> to vector<8x16xf32>
    %173 = arith.addf %171, %172 : vector<8x16xf32>
    %174 = tpu.concatenate %173, %143 in 1 : vector<8x16xf32>, vector<8x16xf32> -> vector<8x32xf32>
    %175 = vector.shape_cast %100 : vector<8x32xf32> to vector<1x8x32xf32>
    %176 = vector.shape_cast %174 : vector<8x32xf32> to vector<1x8x32xf32>
    %177 = tpu.concatenate %175, %176 in 0 : vector<1x8x32xf32>, vector<1x8x32xf32> -> vector<2x8x32xf32>
    %c0_58 = arith.constant 0 : index
    %c0_59 = arith.constant 0 : index
    %c0_60 = arith.constant 0 : index
    %178 = vector.load %arg8[%c0_58, %c0_59, %c0_60] : memref<2x8x32xf32, #tpu.memory_space<vmem>>, vector<2x8x32xf32>
    tpu.vector_store %arg8[%c0_58, %c0_59, %c0_60], %177 {strides = array<i32>} : memref<2x8x32xf32, #tpu.memory_space<vmem>>, vector<2x8x32xf32>,
    return
  }
  func.func @transform_0(%arg0: i32) -> (i32, i32, i32) {
    %c0_i32 = arith.constant 0 : i32
    %c0_i32_0 = arith.constant 0 : i32
    %c0_i32_1 = arith.constant 0 : i32
    return %arg0, %c0_i32, %c0_i32_0 : i32, i32, i32
  }
  func.func @transform_1(%arg0: i32) -> (i32, i32, i32) {
    %c0_i32 = arith.constant 0 : i32
    %c0_i32_0 = arith.constant 0 : i32
    %c0_i32_1 = arith.constant 0 : i32
    return %arg0, %c0_i32, %c0_i32_0 : i32, i32, i32
  }
  func.func @transform_2(%arg0: i32) -> (i32, i32) {
    %c0_i32 = arith.constant 0 : i32
    %c0_i32_0 = arith.constant 0 : i32
    %c0_i32_1 = arith.constant 0 : i32
    return %c0_i32, %c0_i32_0 : i32, i32
  }
  func.func @transform_3(%arg0: i32) -> (i32, i32) {
    %c0_i32 = arith.constant 0 : i32
    %c0_i32_0 = arith.constant 0 : i32
    %c0_i32_1 = arith.constant 0 : i32
    return %c0_i32, %c0_i32_0 : i32, i32
  }
  func.func @transform_4(%arg0: i32) -> (i32, i32) {
    %c0_i32 = arith.constant 0 : i32
    %c0_i32_0 = arith.constant 0 : i32
    %c0_i32_1 = arith.constant 0 : i32
    return %c0_i32, %c0_i32_0 : i32, i32
  }
  func.func @transform_5(%arg0: i32) -> (i32, i32) {
    %c0_i32 = arith.constant 0 : i32
    %c0_i32_0 = arith.constant 0 : i32
    %c0_i32_1 = arith.constant 0 : i32
    return %c0_i32, %c0_i32_0 : i32, i32
  }
  func.func @transform_6(%arg0: i32) -> (i32, i32) {
    %c0_i32 = arith.constant 0 : i32
    %c0_i32_0 = arith.constant 0 : i32
    %c0_i32_1 = arith.constant 0 : i32
    return %c0_i32, %c0_i32_0 : i32, i32
  }
  func.func @transform_7(%arg0: i32) -> (i32, i32, i32) {
    %c0_i32 = arith.constant 0 : i32
    %c0_i32_0 = arith.constant 0 : i32
    %c0_i32_1 = arith.constant 0 : i32
    return %arg0, %c0_i32, %c0_i32_0 : i32, i32, i32
  }
}

</mosaic_0001>

<llo_original>
// kernel: tpu_custom_call.1
$region0: #{tpu_custom_call.1}
  #allocation0 [shape = 'u32[]', space=smem, size = 0x4, offset = 0x4, fixed_abs, tag = 'smem constant byte address 0x4 - core index']
  #allocation1 [shape = 'u32[72,128]{1,0:T(1,128)}', space=vmem, size = 0x9000, scoped, tag = 'internal scratch']
  %s0 = inlined_call_operand.vmem [shape: f32[2,8,32], index: 0, kind: input, shape index: {}]
  %s1 = inlined_call_operand.vmem [shape: f32[2,8,32], index: 1, kind: input, shape index: {}]
  %s2 = inlined_call_operand.vmem [shape: f32[64,96], index: 2, kind: input, shape index: {}]
  %s3 = inlined_call_operand.vmem [shape: f32[8,4], index: 3, kind: input, shape index: {}]
  %s4 = inlined_call_operand.vmem [shape: f32[64,16], index: 4, kind: input, shape index: {}]
  %s5 = inlined_call_operand.vmem [shape: f32[7,96], index: 5, kind: input, shape index: {}]
  %s6 = inlined_call_operand.vmem [shape: f32[64,32], index: 6, kind: input, shape index: {}]
  %s7 = inlined_call_operand.hbm [shape: f32[2,8,32], index: 7, kind: output, shape index: {}]
  %s8 = sld [smem:[#allocation0]]
  $region38: #{tpu_custom_call.1} parent=0
    _
  %s10 = ssub.s32 1, %s8
  %s11 = scalar_select 0, %s10, %s8
  $region1: #{tpu_custom_call.1} parent=0
    #allocation2 [shape = 'u8[8192]{0}', space=vmem, size = 0x2000, scoped, tag = 'output window, operand 0, single buffered']
    #allocation3 [shape = 's32[1]{0}', space=sflag, size = 0x4, scoped, tag = 'scoped memory for tpu_custom_call.1']
    %12 = vsyncpa [#allocation3], 0
    // Predicated region
    $region2: #{tpu_custom_call.1} parent=1 // pred_check
      _
    $region3: #{tpu_custom_call.1} parent=1 // pred_check_branch
      %14 = sbr.rel (0) target = $region5
    $region4: #{tpu_custom_call.1} parent=1 // pred_region
      _
    $region5: #{tpu_custom_call.1} parent=1 // pred_fallthru
      _
    // Predicated region
    $region6: #{tpu_custom_call.1} parent=1 // pred_check
      _
    $region7: #{tpu_custom_call.1} parent=1 // pred_check_branch
      %16 = sbr.rel (0) target = $region9
    $region8: #{tpu_custom_call.1} parent=1 // pred_region
      _
    $region9: #{tpu_custom_call.1} parent=1 // pred_fallthru
      _
    // Predicated region
    $region10: #{tpu_custom_call.1} parent=1 // pred_check
      _
    $region11: #{tpu_custom_call.1} parent=1 // pred_check_branch
      %18 = sbr.rel (0) target = $region13
    $region12: #{tpu_custom_call.1} parent=1 // pred_region
      _
    $region13: #{tpu_custom_call.1} parent=1 // pred_fallthru
      _
    // Predicated region
    $region14: #{tpu_custom_call.1} parent=1 // pred_check
      _
    $region15: #{tpu_custom_call.1} parent=1 // pred_check_branch
      %20 = sbr.rel (0) target = $region17
    $region16: #{tpu_custom_call.1} parent=1 // pred_region
      _
    $region17: #{tpu_custom_call.1} parent=1 // pred_fallthru
      _
    // Predicated region
    $region18: #{tpu_custom_call.1} parent=1 // pred_check
      _
    $region19: #{tpu_custom_call.1} parent=1 // pred_check_branch
      %22 = sbr.rel (0) target = $region21
    $region20: #{tpu_custom_call.1} parent=1 // pred_region
      _
    $region21: #{tpu_custom_call.1} parent=1 // pred_fallthru
      _
    // Predicated region
    $region22: #{tpu_custom_call.1} parent=1 // pred_check
      _
    $region23: #{tpu_custom_call.1} parent=1 // pred_check_branch
      %24 = sbr.rel (0) target = $region25
    $region24: #{tpu_custom_call.1} parent=1 // pred_region
      _
    $region25: #{tpu_custom_call.1} parent=1 // pred_fallthru
      _
    // Predicated region
    $region26: #{tpu_custom_call.1} parent=1 // pred_check
      _
    $region27: #{tpu_custom_call.1} parent=1 // pred_check_branch
      %26 = sbr.rel (0) target = $region29
    $region28: #{tpu_custom_call.1} parent=1 // pred_region
      _
    $region29: #{tpu_custom_call.1} parent=1 // pred_fallthru
      _
    %v27 = vld [vmem:[%s2] sm:$0xff]
    %v28 = vld [vmem:[%s2 + $0x8] sm:$0xff]
    %v29 = vld [vmem:[%s2 + $0x10] sm:$0xff]
    %v30 = vld [vmem:[%s2 + $0x18] sm:$0xff]
    %v31 = vld [vmem:[%s2 + $0x20] sm:$0xff]
    %v32 = vld [vmem:[%s2 + $0x28] sm:$0xff]
    %v33 = vld [vmem:[%s2 + $0x30] sm:$0xff]
    %v34 = vld [vmem:[%s2 + $0x38] sm:$0xff]
    %v35 = vld [vmem:[%s4] sm:$0xff]
    %v36 = vld [vmem:[%s4 + $0x8] sm:$0xff]
    %v37 = vld [vmem:[%s4 + $0x10] sm:$0xff]
    %v38 = vld [vmem:[%s4 + $0x18] sm:$0xff]
    %v39 = vld [vmem:[%s4 + $0x20] sm:$0xff]
    %v40 = vld [vmem:[%s4 + $0x28] sm:$0xff]
    %v41 = vld [vmem:[%s4 + $0x30] sm:$0xff]
    %v42 = vld [vmem:[%s4 + $0x38] sm:$0xff]
    %v43 = vld [vmem:[%s5] sm:$0x7f]
    %v44 = vld [vmem:[%s6] sm:$0xff]
    %v45 = vld [vmem:[%s6 + $0x8] sm:$0xff]
    %v46 = vld [vmem:[%s6 + $0x10] sm:$0xff]
    %v47 = vld [vmem:[%s6 + $0x18] sm:$0xff]
    %v48 = vld [vmem:[%s6 + $0x20] sm:$0xff]
    %v49 = vld [vmem:[%s6 + $0x28] sm:$0xff]
    %v50 = vld [vmem:[%s6 + $0x30] sm:$0xff]
    %v51 = vld [vmem:[%s6 + $0x38] sm:$0xff]
    %v52 = vld [vmem:[%s0] sm:$0xff]
    %v53 = vld [vmem:[%s0 + $0x8] sm:$0xff]
    %v54 = vld [vmem:[%s1] sm:$0xff]
    %v55 = vld [vmem:[%s1 + $0x8] sm:$0xff]
    %v56 = vperm.slane %v43, 0
    %vm57 = vcmask 261120
    %v59 = vsel %vm57, %v52, 0
    %v62 = vsel %vm57, %v53, 0
    %64 = vmatpush.msra.mxu0 0.0
    %65 = vmatpush.msra.mxu0 0.0
    %66 = vmatpush.msra.mxu0 0.0
    %67 = vmatpush.msra.mxu0 0.0
    %68 = vmatpush.msra.mxu0 0.0
    %69 = vmatpush.msra.mxu0 0.0
    %70 = vmatpush.msra.mxu0 0.0
    %71 = vmatpush.msra.mxu0 0.0
    %72 = vmatpush.msra.mxu0 0.0
    %73 = vmatpush.msra.mxu0 0.0
    %74 = vmatpush.msra.mxu0 0.0
    %75 = vmatpush.msra.mxu0 0.0
    %76 = vmatpush.msra.mxu0 %v30
    %77 = vmatpush.msra.mxu0 %v29
    %78 = vmatpush.msra.mxu0 %v28
    %79 = vmatpush.msra.mxu0 %v27
    %80 = vmatmul.f32.gmra.mxu0 %v59
    %v81 = vpop.f32.mrf.mxu0
    %v82 = vadd.f32 %v56, %v81
    %83 = vmatmul.f32.gmra.mxu0 %v62
    %v84 = vpop.f32.mrf.mxu0
    %v85 = vadd.f32 %v56, %v84
    %86 = vdwg.mxu0
    %v87 = vperm.slane %v43, 1
    %v89 = vsel %vm57, %v54, 0
    %v92 = vsel %vm57, %v55, 0
    %94 = vmatpush.msra.mxu0 0.0
    %95 = vmatpush.msra.mxu0 0.0
    %96 = vmatpush.msra.mxu0 0.0
    %97 = vmatpush.msra.mxu0 0.0
    %98 = vmatpush.msra.mxu0 0.0
    %99 = vmatpush.msra.mxu0 0.0
    %100 = vmatpush.msra.mxu0 0.0
    %101 = vmatpush.msra.mxu0 0.0
    %102 = vmatpush.msra.mxu0 0.0
    %103 = vmatpush.msra.mxu0 0.0
    %104 = vmatpush.msra.mxu0 0.0
    %105 = vmatpush.msra.mxu0 0.0
    %106 = vmatpush.msra.mxu0 %v34
    %107 = vmatpush.msra.mxu0 %v33
    %108 = vmatpush.msra.mxu0 %v32
    %109 = vmatpush.msra.mxu0 %v31
    %110 = vmatmul.f32.gmra.mxu0 %v89
    %v111 = vpop.f32.mrf.mxu0
    %v112 = vadd.f32 %v87, %v111
    %113 = vmatmul.f32.gmra.mxu0 %v92
    %v114 = vpop.f32.mrf.mxu0
    %v115 = vadd.f32 %v87, %v114
    %116 = vdwg.mxu0
    %v117 = vmul.f32 %v82, %v82
    %v118 = vsel %vm57, %v117, 0.0
    %v119 = vrot.slane %v118, 4
    %v120 = vadd.f32 %v118, %v119
    %v121 = vrot.slane %v120, 2
    %v122 = vadd.f32 %v120, %v121
    %v123 = vrot.slane %v122, 1
    %v124 = vadd.f32 %v122, %v123
    %v125 = vrsqrt.pop %v124
    %v126 = vmul.f32 %v125, %v124
    %v127 = vmul.f32 %v126, %v125
    %v128 = vmul.f32 0.5, %v127
    %v129 = vsub.f32 1.5, %v128
    %v130 = vmul.f32 %v125, %v129
    %v131 = vmul.f32 %v124, %v130
    %vm132 = vcmp.eq.f32.partialorder %v124, inf
    %v133 = vsel %vm132, %v124, %v131
    %vm134 = vcmp.eq.f32.partialorder %v124, 0.0
    %v135 = vand.u32 %v124, 2147483648
    %v136 = vsel %vm134, %v135, %v133
    %v137 = vmax.f32 %v136, 1e-12
    %v138 = vrcp.pop %v137
    %v139 = vmul.f32 %v137, %v138
    %v140 = vsub.f32 1.0, %v139
    %v141 = vmul.f32 %v138, %v140
    %v142 = vadd.f32 %v138, %v141
    %vm143 = vweird.f32 %v137
    %vm144 = vweird.f32 %v138
    %vm145 = vmor %vm143, %vm144
    %v146 = vsel %vm145, %v138, %v142
    %v147 = vand.u32 2147483647, %v137
    %vm148 = vcmp.eq.f32.partialorder %v147, 8.507059e+37
    %v149 = vand.u32 %v137, 2147483648
    %v150 = vor.u32 1.1754944e-38, %v149
    %v151 = vsel %vm148, %v150, %v146
    %v152 = vmul.f32 1.0, %v151
    %v153 = vmul.f32 %v82, %v152
    %v154 = vmul.f32 %v112, %v112
    %v155 = vsel %vm57, %v154, 0.0
    %v156 = vrot.slane %v155, 4
    %v157 = vadd.f32 %v155, %v156
    %v158 = vrot.slane %v157, 2
    %v159 = vadd.f32 %v157, %v158
    %v160 = vrot.slane %v159, 1
    %v161 = vadd.f32 %v159, %v160
    %v162 = vrsqrt.pop %v161
    %v163 = vmul.f32 %v162, %v161
    %v164 = vmul.f32 %v163, %v162
    %v165 = vmul.f32 0.5, %v164
    %v166 = vsub.f32 1.5, %v165
    %v167 = vmul.f32 %v162, %v166
    %v168 = vmul.f32 %v161, %v167
    %vm169 = vcmp.eq.f32.partialorder %v161, inf
    %v170 = vsel %vm169, %v161, %v168
    %vm171 = vcmp.eq.f32.partialorder %v161, 0.0
    %v172 = vand.u32 %v161, 2147483648
    %v173 = vsel %vm171, %v172, %v170
    %v174 = vmax.f32 %v173, 1e-12
    %v175 = vrcp.pop %v174
    %v176 = vmul.f32 %v174, %v175
    %v177 = vsub.f32 1.0, %v176
    %v178 = vmul.f32 %v175, %v177
    %v179 = vadd.f32 %v175, %v178
    %vm180 = vweird.f32 %v174
    %vm181 = vweird.f32 %v175
    %vm182 = vmor %vm180, %vm181
    %v183 = vsel %vm182, %v175, %v179
    %v184 = vand.u32 2147483647, %v174
    %vm185 = vcmp.eq.f32.partialorder %v184, 8.507059e+37
    %v186 = vand.u32 %v174, 2147483648
    %v187 = vor.u32 1.1754944e-38, %v186
    %v188 = vsel %vm185, %v187, %v183
    %v189 = vmul.f32 1.0, %v188
    %v190 = vmul.f32 %v112, %v189
    %v191 = vperm.slane %v43, 5
    %v192 = vmul.f32 %v153, %v191
    %193 = vxpose.xlu0.b32.start [1/16] %v192, 128
    %194 = vxpose.xlu0.b32.cont [2/16] 0.0, 128
    %195 = vxpose.xlu0.b32.cont [3/16] 0.0, 128
    %196 = vxpose.xlu0.b32.cont [4/16] 0.0, 128
    %197 = vxpose.xlu0.b32.cont [5/16] 0.0, 128
    %198 = vxpose.xlu0.b32.cont [6/16] 0.0, 128
    %199 = vxpose.xlu0.b32.cont [7/16] 0.0, 128
    %200 = vxpose.xlu0.b32.cont [8/16] 0.0, 128
    %201 = vxpose.xlu0.b32.cont [9/16] 0.0, 128
    %202 = vxpose.xlu0.b32.cont [10/16] 0.0, 128
    %203 = vxpose.xlu0.b32.cont [11/16] 0.0, 128
    %204 = vxpose.xlu0.b32.cont [12/16] 0.0, 128
    %205 = vxpose.xlu0.b32.cont [13/16] 0.0, 128
    %206 = vxpose.xlu0.b32.cont [14/16] 0.0, 128
    %207 = vxpose.xlu0.b32.cont [15/16] 0.0, 128
    %208 = vxpose.xlu0.b32.end [16/16] 0.0, 128
    %v209 = vpop.trf.xlu0
    %v210 = vpop.trf.xlu0
    %v211 = vpop.trf.xlu0
    %v212 = vpop.trf.xlu0
    %v213 = vpop.trf.xlu0
    %v214 = vpop.trf.xlu0
    %v215 = vpop.trf.xlu0
    %v216 = vpop.trf.xlu0
    %v217 = vpop.trf.xlu0
    %v218 = vpop.trf.xlu0
    %v219 = vpop.trf.xlu0
    %v220 = vpop.trf.xlu0
    %v221 = vpop.trf.xlu0
    %v222 = vpop.trf.xlu0
    %v223 = vpop.trf.xlu0
    %v224 = vpop.trf.xlu0
    %vm225 = vcmask 64512
    %v227 = vsel %vm225, %v209, 0
    %v230 = vsel %vm225, %v210, 0
    %v233 = vsel %vm225, %v211, 0
    %v236 = vsel %vm225, %v212, 0
    %238 = vmatpush.msra.mxu0 0.0
    %239 = vmatpush.msra.mxu0 0.0
    %240 = vmatpush.msra.mxu0 0.0
    %241 = vmatpush.msra.mxu0 0.0
    %242 = vmatpush.msra.mxu0 0.0
    %243 = vmatpush.msra.mxu0 0.0
    %244 = vmatpush.msra.mxu0 0.0
    %245 = vmatpush.msra.mxu0 0.0
    %246 = vmatpush.msra.mxu0 0.0
    %247 = vmatpush.msra.mxu0 0.0
    %248 = vmatpush.msra.mxu0 0.0
    %249 = vmatpush.msra.mxu0 0.0
    %250 = vmatpush.msra.mxu0 0.0
    %251 = vmatpush.msra.mxu0 0.0
    %252 = vmatpush.msra.mxu0 0.0
    %253 = vmatpush.msra.mxu0 %v190
    %254 = vmatmul.f32.gmra.mxu0 %v227
    %v255 = vpop.f32.mrf.mxu0
    %v256 = vadd.f32 %v44, %v255
    %257 = vmatmul.f32.gmra.mxu0 %v230
    %v258 = vpop.f32.mrf.mxu0
    %v259 = vadd.f32 %v45, %v258
    %260 = vmatmul.f32.gmra.mxu0 %v233
    %v261 = vpop.f32.mrf.mxu0
    %v262 = vadd.f32 %v46, %v261
    %263 = vmatmul.f32.gmra.mxu0 %v236
    %v264 = vpop.f32.mrf.mxu0
    %v265 = vadd.f32 %v47, %v264
    %266 = vdwg.mxu0
    %v267 = vsel %vm57, %v256, -inf
    %268 = vmax.xlane.f32.xlu0 %v267
    %v269 = vpop.xlane.xlu0 %268
    %v270 = vsel %vm57, %v259, -inf
    %271 = vmax.xlane.f32.xlu0 %v270
    %v272 = vpop.xlane.xlu0 %271
    %v273 = vsel %vm57, %v262, -inf
    %274 = vmax.xlane.f32.xlu0 %v273
    %v275 = vpop.xlane.xlu0 %274
    %v276 = vsel %vm57, %v265, -inf
    %277 = vmax.xlane.f32.xlu0 %v276
    %v278 = vpop.xlane.xlu0 %277
    %v279 = vsub.f32 %v256, %v269
    %v280 = vsub.f32 %v259, %v272
    %v281 = vsub.f32 %v262, %v275
    %v282 = vsub.f32 %v265, %v278
    %v283 = vmul.f32 %v279, 1.442695
    %v284 = vpow.pop %v283
    %v285 = vmul.f32 %v280, 1.442695
    %v286 = vpow.pop %v285
    %v287 = vmul.f32 %v281, 1.442695
    %v288 = vpow.pop %v287
    %v289 = vmul.f32 %v282, 1.442695
    %v290 = vpow.pop %v289
    %v291 = vsel %vm57, %v284, 0.0
    %292 = vadd.xlane.f32.xlu0 %v291
    %v293 = vpop.xlane.xlu0 %292
    %v294 = vsel %vm57, %v286, 0.0
    %295 = vadd.xlane.f32.xlu0 %v294
    %v296 = vpop.xlane.xlu0 %295
    %v297 = vsel %vm57, %v288, 0.0
    %298 = vadd.xlane.f32.xlu0 %v297
    %v299 = vpop.xlane.xlu0 %298
    %v300 = vsel %vm57, %v290, 0.0
    %301 = vadd.xlane.f32.xlu0 %v300
    %v302 = vpop.xlane.xlu0 %301
    %v303 = vrcp.pop %v293
    %v304 = vmul.f32 %v293, %v303
    %v305 = vsub.f32 1.0, %v304
    %v306 = vmul.f32 %v303, %v305
    %v307 = vadd.f32 %v303, %v306
    %vm308 = vweird.f32 %v293
    %vm309 = vweird.f32 %v303
    %vm310 = vmor %vm308, %vm309
    %v311 = vsel %vm310, %v303, %v307
    %v312 = vand.u32 2147483647, %v293
    %vm313 = vcmp.eq.f32.partialorder %v312, 8.507059e+37
    %v314 = vand.u32 %v293, 2147483648
    %v315 = vor.u32 1.1754944e-38, %v314
    %v316 = vsel %vm313, %v315, %v311
    %v317 = vmul.f32 1.0, %v316
    %v318 = vrcp.pop %v296
    %v319 = vmul.f32 %v296, %v318
    %v320 = vsub.f32 1.0, %v319
    %v321 = vmul.f32 %v318, %v320
    %v322 = vadd.f32 %v318, %v321
    %vm323 = vweird.f32 %v296
    %vm324 = vweird.f32 %v318
    %vm325 = vmor %vm323, %vm324
    %v326 = vsel %vm325, %v318, %v322
    %v327 = vand.u32 2147483647, %v296
    %vm328 = vcmp.eq.f32.partialorder %v327, 8.507059e+37
    %v329 = vand.u32 %v296, 2147483648
    %v330 = vor.u32 1.1754944e-38, %v329
    %v331 = vsel %vm328, %v330, %v326
    %v332 = vmul.f32 1.0, %v331
    %v333 = vrcp.pop %v299
    %v334 = vmul.f32 %v299, %v333
    %v335 = vsub.f32 1.0, %v334
    %v336 = vmul.f32 %v333, %v335
    %v337 = vadd.f32 %v333, %v336
    %vm338 = vweird.f32 %v299
    %vm339 = vweird.f32 %v333
    %vm340 = vmor %vm338, %vm339
    %v341 = vsel %vm340, %v333, %v337
    %v342 = vand.u32 2147483647, %v299
    %vm343 = vcmp.eq.f32.partialorder %v342, 8.507059e+37
    %v344 = vand.u32 %v299, 2147483648
    %v345 = vor.u32 1.1754944e-38, %v344
    %v346 = vsel %vm343, %v345, %v341
    %v347 = vmul.f32 1.0, %v346
    %v348 = vrcp.pop %v302
    %v349 = vmul.f32 %v302, %v348
    %v350 = vsub.f32 1.0, %v349
    %v351 = vmul.f32 %v348, %v350
    %v352 = vadd.f32 %v348, %v351
    %vm353 = vweird.f32 %v302
    %vm354 = vweird.f32 %v348
    %vm355 = vmor %vm353, %vm354
    %v356 = vsel %vm355, %v348, %v352
    %v357 = vand.u32 2147483647, %v302
    %vm358 = vcmp.eq.f32.partialorder %v357, 8.507059e+37
    %v359 = vand.u32 %v302, 2147483648
    %v360 = vor.u32 1.1754944e-38, %v359
    %v361 = vsel %vm358, %v360, %v356
    %v362 = vmul.f32 1.0, %v361
    %v363 = vmul.f32 %v284, %v317
    %v364 = vmul.f32 %v286, %v332
    %v365 = vmul.f32 %v288, %v347
    %v366 = vmul.f32 %v290, %v362
    %368 = vrot.lane.b32.xlu0 %v112, 96
    %v369 = vpop.permute.xlu0 %368
    %v370 = vsel %vm57, %v369, 0
    %v373 = vsel %vm57, %v363, 0
    %v376 = vsel %vm57, %v364, 0
    %v379 = vsel %vm57, %v365, 0
    %v382 = vsel %vm57, %v366, 0
    %384 = vmatpush.xpose.msra.mxu0 0.0
    %385 = vmatpush.xpose.msra.mxu0 0.0
    %386 = vmatpush.xpose.msra.mxu0 0.0
    %387 = vmatpush.xpose.msra.mxu0 0.0
    %388 = vmatpush.xpose.msra.mxu0 0.0
    %389 = vmatpush.xpose.msra.mxu0 0.0
    %390 = vmatpush.xpose.msra.mxu0 0.0
    %391 = vmatpush.xpose.msra.mxu0 0.0
    %392 = vmatpush.xpose.msra.mxu0 0.0
    %393 = vmatpush.xpose.msra.mxu0 0.0
    %394 = vmatpush.xpose.msra.mxu0 0.0
    %395 = vmatpush.xpose.msra.mxu0 0.0
    %396 = vmatpush.xpose.msra.mxu0 %v382
    %397 = vmatpush.xpose.msra.mxu0 %v379
    %398 = vmatpush.xpose.msra.mxu0 %v376
    %399 = vmatpush.xpose.msra.mxu0 %v373
    %400 = vmatmul.f32.gmra.mxu0 %v370
    %v401 = vpop.f32.mrf.mxu0
    %v402 = vadd.f32 0.0, %v401
    %403 = vdwg.mxu0
    %v404 = vperm.slane %v43, 4
    %v406 = vsel %vm57, %v402, 0
    %408 = vmatpush.msra.mxu0 0.0
    %409 = vmatpush.msra.mxu0 0.0
    %410 = vmatpush.msra.mxu0 0.0
    %411 = vmatpush.msra.mxu0 0.0
    %412 = vmatpush.msra.mxu0 0.0
    %413 = vmatpush.msra.mxu0 0.0
    %414 = vmatpush.msra.mxu0 0.0
    %415 = vmatpush.msra.mxu0 0.0
    %416 = vmatpush.msra.mxu0 0.0
    %417 = vmatpush.msra.mxu0 0.0
    %418 = vmatpush.msra.mxu0 0.0
    %419 = vmatpush.msra.mxu0 0.0
    %420 = vmatpush.msra.mxu0 %v42
    %421 = vmatpush.msra.mxu0 %v41
    %422 = vmatpush.msra.mxu0 %v40
    %423 = vmatpush.msra.mxu0 %v39
    %424 = vmatmul.f32.gmra.mxu0 %v406
    %v425 = vpop.f32.mrf.mxu0
    %v426 = vadd.f32 %v404, %v425
    %427 = vdwg.mxu0
    %v429 = vsel %vm57, %v190, %v369
    %v430 = vld [vmem:[%s3] sm:$0xff]
    %v431 = vperm.slane %v43, 2
    %432 = vxpose.xlu0.b32.start [1/16] %v429, 128
    %433 = vxpose.xlu0.b32.cont [2/16] 0.0, 128
    %434 = vxpose.xlu0.b32.cont [3/16] 0.0, 128
    %435 = vxpose.xlu0.b32.cont [4/16] 0.0, 128
    %436 = vxpose.xlu0.b32.cont [5/16] 0.0, 128
    %437 = vxpose.xlu0.b32.cont [6/16] 0.0, 128
    %438 = vxpose.xlu0.b32.cont [7/16] 0.0, 128
    %439 = vxpose.xlu0.b32.cont [8/16] 0.0, 128
    %440 = vxpose.xlu0.b32.cont [9/16] 0.0, 128
    %441 = vxpose.xlu0.b32.cont [10/16] 0.0, 128
    %442 = vxpose.xlu0.b32.cont [11/16] 0.0, 128
    %443 = vxpose.xlu0.b32.cont [12/16] 0.0, 128
    %444 = vxpose.xlu0.b32.cont [13/16] 0.0, 128
    %445 = vxpose.xlu0.b32.cont [14/16] 0.0, 128
    %446 = vxpose.xlu0.b32.cont [15/16] 0.0, 128
    %447 = vxpose.xlu0.b32.end [16/16] 0.0, 128
    %v448 = vpop.trf.xlu0
    %v449 = vpop.trf.xlu0
    %v450 = vpop.trf.xlu0
    %v451 = vpop.trf.xlu0
    %v452 = vpop.trf.xlu0
    %v453 = vpop.trf.xlu0
    %v454 = vpop.trf.xlu0
    %v455 = vpop.trf.xlu0
    %v456 = vpop.trf.xlu0
    %v457 = vpop.trf.xlu0
    %v458 = vpop.trf.xlu0
    %v459 = vpop.trf.xlu0
    %v460 = vpop.trf.xlu0
    %v461 = vpop.trf.xlu0
    %v462 = vpop.trf.xlu0
    %v463 = vpop.trf.xlu0
    %v465 = vsel %vm225, %v448, 0
    %v468 = vsel %vm225, %v449, 0
    %v471 = vsel %vm225, %v450, 0
    %v474 = vsel %vm225, %v451, 0
    %v477 = vsel %vm225, %v452, 0
    %v480 = vsel %vm225, %v453, 0
    %v483 = vsel %vm225, %v454, 0
    %v486 = vsel %vm225, %v455, 0
    %488 = vmatpush.msra.mxu0 0.0
    %489 = vmatpush.msra.mxu0 0.0
    %490 = vmatpush.msra.mxu0 0.0
    %491 = vmatpush.msra.mxu0 0.0
    %492 = vmatpush.msra.mxu0 0.0
    %493 = vmatpush.msra.mxu0 0.0
    %494 = vmatpush.msra.mxu0 0.0
    %495 = vmatpush.msra.mxu0 0.0
    %496 = vmatpush.msra.mxu0 0.0
    %497 = vmatpush.msra.mxu0 0.0
    %498 = vmatpush.msra.mxu0 0.0
    %499 = vmatpush.msra.mxu0 0.0
    %500 = vmatpush.msra.mxu0 0.0
    %501 = vmatpush.msra.mxu0 0.0
    %502 = vmatpush.msra.mxu0 0.0
    %503 = vmatpush.msra.mxu0 %v430
    %504 = vmatmul.f32.gmra.mxu0 %v465
    %v505 = vpop.f32.mrf.mxu0
    %v506 = vadd.f32 %v431, %v505
    %507 = vmatmul.f32.gmra.mxu0 %v468
    %v508 = vpop.f32.mrf.mxu0
    %v509 = vadd.f32 %v431, %v508
    %510 = vmatmul.f32.gmra.mxu0 %v471
    %v511 = vpop.f32.mrf.mxu0
    %v512 = vadd.f32 %v431, %v511
    %513 = vmatmul.f32.gmra.mxu0 %v474
    %v514 = vpop.f32.mrf.mxu0
    %v515 = vadd.f32 %v431, %v514
    %516 = vmatmul.f32.gmra.mxu0 %v477
    %v517 = vpop.f32.mrf.mxu0
    %v518 = vadd.f32 %v431, %v517
    %519 = vmatmul.f32.gmra.mxu0 %v480
    %v520 = vpop.f32.mrf.mxu0
    %v521 = vadd.f32 %v431, %v520
    %522 = vmatmul.f32.gmra.mxu0 %v483
    %v523 = vpop.f32.mrf.mxu0
    %v524 = vadd.f32 %v431, %v523
    %525 = vmatmul.f32.gmra.mxu0 %v486
    %v526 = vpop.f32.mrf.mxu0
    %v527 = vadd.f32 %v431, %v526
    %528 = vdwg.mxu0
    %v529 = vperm.slane %v43, 6
    %v530 = vmul.f32 %v153, %v529
    %v531 = vmul.f32 %v530, %v48
    %v532 = vmul.f32 %v530, %v49
    %v533 = vmul.f32 %v530, %v50
    %v534 = vmul.f32 %v530, %v51
    %v536 = vsel %vm57, %v531, 0
    %v539 = vsel %vm57, %v532, 0
    %v542 = vsel %vm57, %v533, 0
    %v545 = vsel %vm57, %v534, 0
    %547 = vmatpush.msra.mxu0 0.0
    %548 = vmatpush.msra.mxu0 0.0
    %549 = vmatpush.msra.mxu0 0.0
    %550 = vmatpush.msra.mxu0 0.0
    %551 = vmatpush.msra.mxu0 0.0
    %552 = vmatpush.msra.mxu0 0.0
    %553 = vmatpush.msra.mxu0 0.0
    %554 = vmatpush.msra.mxu0 0.0
    %555 = vmatpush.msra.mxu0 0.0
    %556 = vmatpush.msra.mxu0 0.0
    %557 = vmatpush.msra.mxu0 0.0
    %558 = vmatpush.msra.mxu0 0.0
    %559 = vmatpush.msra.mxu0 %v515
    %560 = vmatpush.msra.mxu0 %v512
    %561 = vmatpush.msra.mxu0 %v509
    %562 = vmatpush.msra.mxu0 %v506
    %563 = vmatmul.f32.gmra.mxu0 %v536
    %v564 = vpop.f32.mrf.mxu0
    %v565 = vadd.f32 0.0, %v564
    %566 = vmatmul.f32.gmra.mxu0 %v539
    %v567 = vpop.f32.mrf.mxu0
    %v568 = vadd.f32 0.0, %v567
    %569 = vmatmul.f32.gmra.mxu0 %v542
    %v570 = vpop.f32.mrf.mxu0
    %v571 = vadd.f32 0.0, %v570
    %572 = vmatmul.f32.gmra.mxu0 %v545
    %v573 = vpop.f32.mrf.mxu0
    %v574 = vadd.f32 0.0, %v573
    %575 = vdwg.mxu0
    %vm576 = vcmask 31744
    %v577 = vsel %vm576, %v565, -inf
    %578 = vmax.xlane.f32.xlu0 %v577
    %v579 = vpop.xlane.xlu0 %578
    %v580 = vsel %vm576, %v568, -inf
    %581 = vmax.xlane.f32.xlu0 %v580
    %v582 = vpop.xlane.xlu0 %581
    %v583 = vsel %vm576, %v571, -inf
    %584 = vmax.xlane.f32.xlu0 %v583
    %v585 = vpop.xlane.xlu0 %584
    %v586 = vsel %vm576, %v574, -inf
    %587 = vmax.xlane.f32.xlu0 %v586
    %v588 = vpop.xlane.xlu0 %587
    %v589 = vsub.f32 %v565, %v579
    %v590 = vsub.f32 %v568, %v582
    %v591 = vsub.f32 %v571, %v585
    %v592 = vsub.f32 %v574, %v588
    %v593 = vmul.f32 %v589, 1.442695
    %v594 = vpow.pop %v593
    %v595 = vmul.f32 %v590, 1.442695
    %v596 = vpow.pop %v595
    %v597 = vmul.f32 %v591, 1.442695
    %v598 = vpow.pop %v597
    %v599 = vmul.f32 %v592, 1.442695
    %v600 = vpow.pop %v599
    %v601 = vsel %vm576, %v594, 0.0
    %602 = vadd.xlane.f32.xlu0 %v601
    %v603 = vpop.xlane.xlu0 %602
    %v604 = vsel %vm576, %v596, 0.0
    %605 = vadd.xlane.f32.xlu0 %v604
    %v606 = vpop.xlane.xlu0 %605
    %v607 = vsel %vm576, %v598, 0.0
    %608 = vadd.xlane.f32.xlu0 %v607
    %v609 = vpop.xlane.xlu0 %608
    %v610 = vsel %vm576, %v600, 0.0
    %611 = vadd.xlane.f32.xlu0 %v610
    %v612 = vpop.xlane.xlu0 %611
    %v613 = vrcp.pop %v603
    %v614 = vmul.f32 %v603, %v613
    %v615 = vsub.f32 1.0, %v614
    %v616 = vmul.f32 %v613, %v615
    %v617 = vadd.f32 %v613, %v616
    %vm618 = vweird.f32 %v603
    %vm619 = vweird.f32 %v613
    %vm620 = vmor %vm618, %vm619
    %v621 = vsel %vm620, %v613, %v617
    %v622 = vand.u32 2147483647, %v603
    %vm623 = vcmp.eq.f32.partialorder %v622, 8.507059e+37
    %v624 = vand.u32 %v603, 2147483648
    %v625 = vor.u32 1.1754944e-38, %v624
    %v626 = vsel %vm623, %v625, %v621
    %v627 = vmul.f32 1.0, %v626
    %v628 = vrcp.pop %v606
    %v629 = vmul.f32 %v606, %v628
    %v630 = vsub.f32 1.0, %v629
    %v631 = vmul.f32 %v628, %v630
    %v632 = vadd.f32 %v628, %v631
    %vm633 = vweird.f32 %v606
    %vm634 = vweird.f32 %v628
    %vm635 = vmor %vm633, %vm634
    %v636 = vsel %vm635, %v628, %v632
    %v637 = vand.u32 2147483647, %v606
    %vm638 = vcmp.eq.f32.partialorder %v637, 8.507059e+37
    %v639 = vand.u32 %v606, 2147483648
    %v640 = vor.u32 1.1754944e-38, %v639
    %v641 = vsel %vm638, %v640, %v636
    %v642 = vmul.f32 1.0, %v641
    %v643 = vrcp.pop %v609
    %v644 = vmul.f32 %v609, %v643
    %v645 = vsub.f32 1.0, %v644
    %v646 = vmul.f32 %v643, %v645
    %v647 = vadd.f32 %v643, %v646
    %vm648 = vweird.f32 %v609
    %vm649 = vweird.f32 %v643
    %vm650 = vmor %vm648, %vm649
    %v651 = vsel %vm650, %v643, %v647
    %v652 = vand.u32 2147483647, %v609
    %vm653 = vcmp.eq.f32.partialorder %v652, 8.507059e+37
    %v654 = vand.u32 %v609, 2147483648
    %v655 = vor.u32 1.1754944e-38, %v654
    %v656 = vsel %vm653, %v655, %v651
    %v657 = vmul.f32 1.0, %v656
    %v658 = vrcp.pop %v612
    %v659 = vmul.f32 %v612, %v658
    %v660 = vsub.f32 1.0, %v659
    %v661 = vmul.f32 %v658, %v660
    %v662 = vadd.f32 %v658, %v661
    %vm663 = vweird.f32 %v612
    %vm664 = vweird.f32 %v658
    %vm665 = vmor %vm663, %vm664
    %v666 = vsel %vm665, %v658, %v662
    %v667 = vand.u32 2147483647, %v612
    %vm668 = vcmp.eq.f32.partialorder %v667, 8.507059e+37
    %v669 = vand.u32 %v612, 2147483648
    %v670 = vor.u32 1.1754944e-38, %v669
    %v671 = vsel %vm668, %v670, %v666
    %v672 = vmul.f32 1.0, %v671
    %v673 = vmul.f32 %v594, %v627
    %v674 = vmul.f32 %v596, %v642
    %v675 = vmul.f32 %v598, %v657
    %v676 = vmul.f32 %v600, %v672
    %v678 = vsel %vm576, %v673, 0
    %v681 = vsel %vm576, %v674, 0
    %v684 = vsel %vm576, %v675, 0
    %v687 = vsel %vm576, %v676, 0
    %v690 = vsel %vm576, %v518, 0
    %v693 = vsel %vm576, %v521, 0
    %v696 = vsel %vm576, %v524, 0
    %v699 = vsel %vm576, %v527, 0
    %701 = vmatpush.xpose.msra.mxu0 0.0
    %702 = vmatpush.xpose.msra.mxu0 0.0
    %703 = vmatpush.xpose.msra.mxu0 0.0
    %704 = vmatpush.xpose.msra.mxu0 0.0
    %705 = vmatpush.xpose.msra.mxu0 0.0
    %706 = vmatpush.xpose.msra.mxu0 0.0
    %707 = vmatpush.xpose.msra.mxu0 0.0
    %708 = vmatpush.xpose.msra.mxu0 0.0
    %709 = vmatpush.xpose.msra.mxu0 0.0
    %710 = vmatpush.xpose.msra.mxu0 0.0
    %711 = vmatpush.xpose.msra.mxu0 0.0
    %712 = vmatpush.xpose.msra.mxu0 0.0
    %713 = vmatpush.xpose.msra.mxu0 %v699
    %714 = vmatpush.xpose.msra.mxu0 %v696
    %715 = vmatpush.xpose.msra.mxu0 %v693
    %716 = vmatpush.xpose.msra.mxu0 %v690
    %717 = vmatmul.f32.gmra.mxu0 %v678
    %v718 = vpop.f32.mrf.mxu0
    %v719 = vadd.f32 0.0, %v718
    %720 = vmatmul.f32.gmra.mxu0 %v681
    %v721 = vpop.f32.mrf.mxu0
    %v722 = vadd.f32 0.0, %v721
    %723 = vmatmul.f32.gmra.mxu0 %v684
    %v724 = vpop.f32.mrf.mxu0
    %v725 = vadd.f32 0.0, %v724
    %726 = vmatmul.f32.gmra.mxu0 %v687
    %v727 = vpop.f32.mrf.mxu0
    %v728 = vadd.f32 0.0, %v727
    %729 = vdwg.mxu0
    %v730 = vmul.f32 %v719, %v48
    %v731 = vmul.f32 %v722, %v49
    %v732 = vmul.f32 %v725, %v50
    %v733 = vmul.f32 %v728, %v51
    %734 = vxpose.xlu0.b32.start [1/16] %v730, 128
    %735 = vxpose.xlu0.b32.cont [2/16] %v731, 128
    %736 = vxpose.xlu0.b32.cont [3/16] %v732, 128
    %737 = vxpose.xlu0.b32.cont [4/16] %v733, 128
    %738 = vxpose.xlu0.b32.cont [5/16] 0.0, 128
    %739 = vxpose.xlu0.b32.cont [6/16] 0.0, 128
    %740 = vxpose.xlu0.b32.cont [7/16] 0.0, 128
    %741 = vxpose.xlu0.b32.cont [8/16] 0.0, 128
    %742 = vxpose.xlu0.b32.cont [9/16] 0.0, 128
    %743 = vxpose.xlu0.b32.cont [10/16] 0.0, 128
    %744 = vxpose.xlu0.b32.cont [11/16] 0.0, 128
    %745 = vxpose.xlu0.b32.cont [12/16] 0.0, 128
    %746 = vxpose.xlu0.b32.cont [13/16] 0.0, 128
    %747 = vxpose.xlu0.b32.cont [14/16] 0.0, 128
    %748 = vxpose.xlu0.b32.cont [15/16] 0.0, 128
    %749 = vxpose.xlu0.b32.end [16/16] 0.0, 128
    %v750 = vpop.trf.xlu0
    %v751 = vpop.trf.xlu0
    %v752 = vpop.trf.xlu0
    %v753 = vpop.trf.xlu0
    %v754 = vpop.trf.xlu0
    %v755 = vpop.trf.xlu0
    %v756 = vpop.trf.xlu0
    %v757 = vpop.trf.xlu0
    %v758 = vpop.trf.xlu0
    %v759 = vpop.trf.xlu0
    %v760 = vpop.trf.xlu0
    %v761 = vpop.trf.xlu0
    %v762 = vpop.trf.xlu0
    %v763 = vpop.trf.xlu0
    %v764 = vpop.trf.xlu0
    %v765 = vpop.trf.xlu0
    %v767 = vsel %vm57, %v750, 0
    %v770 = vsel %vm57, %v751, 0
    %v773 = vsel %vm57, %v752, 0
    %v776 = vsel %vm57, %v753, 0
    %778 = vmatpush.msra.mxu0 0.0
    %779 = vmatpush.msra.mxu0 0.0
    %780 = vmatpush.msra.mxu0 0.0
    %781 = vmatpush.msra.mxu0 0.0
    %782 = vmatpush.msra.mxu0 0.0
    %783 = vmatpush.msra.mxu0 0.0
    %784 = vmatpush.msra.mxu0 0.0
    %785 = vmatpush.msra.mxu0 0.0
    %786 = vmatpush.msra.mxu0 0.0
    %787 = vmatpush.msra.mxu0 0.0
    %788 = vmatpush.msra.mxu0 0.0
    %789 = vmatpush.msra.mxu0 0.0
    %790 = vmatpush.msra.mxu0 %v38
    %791 = vmatpush.msra.mxu0 %v37
    %792 = vmatpush.msra.mxu0 %v36
    %793 = vmatpush.msra.mxu0 %v35
    %794 = vmatmul.f32.gmra.mxu0 %v767
    %v795 = vpop.f32.mrf.mxu0
    %v796 = vadd.f32 0.0, %v795
    %797 = vmatmul.f32.gmra.mxu0 %v770
    %v798 = vpop.f32.mrf.mxu0
    %v799 = vadd.f32 0.0, %v798
    %800 = vmatmul.f32.gmra.mxu0 %v773
    %v801 = vpop.f32.mrf.mxu0
    %v802 = vadd.f32 0.0, %v801
    %803 = vmatmul.f32.gmra.mxu0 %v776
    %v804 = vpop.f32.mrf.mxu0
    %v805 = vadd.f32 0.0, %v804
    %806 = vdwg.mxu0
    %vm807 = vcmask 130048
    %v808 = vsel %vm807, %v796, 0.0
    %v809 = vsel %vm807, %v799, 0.0
    %v810 = vadd.f32 %v808, %v809
    %v811 = vsel %vm807, %v802, 0.0
    %v812 = vadd.f32 %v810, %v811
    %v813 = vsel %vm807, %v805, 0.0
    %v814 = vadd.f32 %v812, %v813
    %v815 = vperm.slane %v43, 3
    %v816 = vadd.f32 %v814, %v815
    %818 = vrot.lane.b32.xlu0 %v426, 16
    %v819 = vpop.permute.xlu0 %818
    %v821 = vsel %vm807, %v816, %v819
    %v822 = vmul.f32 %v85, %v85
    %v823 = vsel %vm57, %v822, 0.0
    %v824 = vrot.slane %v823, 4
    %v825 = vadd.f32 %v823, %v824
    %v826 = vrot.slane %v825, 2
    %v827 = vadd.f32 %v825, %v826
    %v828 = vrot.slane %v827, 1
    %v829 = vadd.f32 %v827, %v828
    %v830 = vrsqrt.pop %v829
    %v831 = vmul.f32 %v830, %v829
    %v832 = vmul.f32 %v831, %v830
    %v833 = vmul.f32 0.5, %v832
    %v834 = vsub.f32 1.5, %v833
    %v835 = vmul.f32 %v830, %v834
    %v836 = vmul.f32 %v829, %v835
    %vm837 = vcmp.eq.f32.partialorder %v829, inf
    %v838 = vsel %vm837, %v829, %v836
    %vm839 = vcmp.eq.f32.partialorder %v829, 0.0
    %v840 = vand.u32 %v829, 2147483648
    %v841 = vsel %vm839, %v840, %v838
    %v842 = vmax.f32 %v841, 1e-12
    %v843 = vrcp.pop %v842
    %v844 = vmul.f32 %v842, %v843
    %v845 = vsub.f32 1.0, %v844
    %v846 = vmul.f32 %v843, %v845
    %v847 = vadd.f32 %v843, %v846
    %vm848 = vweird.f32 %v842
    %vm849 = vweird.f32 %v843
    %vm850 = vmor %vm848, %vm849
    %v851 = vsel %vm850, %v843, %v847
    %v852 = vand.u32 2147483647, %v842
    %vm853 = vcmp.eq.f32.partialorder %v852, 8.507059e+37
    %v854 = vand.u32 %v842, 2147483648
    %v855 = vor.u32 1.1754944e-38, %v854
    %v856 = vsel %vm853, %v855, %v851
    %v857 = vmul.f32 1.0, %v856
    %v858 = vmul.f32 %v85, %v857
    %v859 = vmul.f32 %v115, %v115
    %v860 = vsel %vm57, %v859, 0.0
    %v861 = vrot.slane %v860, 4
    %v862 = vadd.f32 %v860, %v861
    %v863 = vrot.slane %v862, 2
    %v864 = vadd.f32 %v862, %v863
    %v865 = vrot.slane %v864, 1
    %v866 = vadd.f32 %v864, %v865
    %v867 = vrsqrt.pop %v866
    %v868 = vmul.f32 %v867, %v866
    %v869 = vmul.f32 %v868, %v867
    %v870 = vmul.f32 0.5, %v869
    %v871 = vsub.f32 1.5, %v870
    %v872 = vmul.f32 %v867, %v871
    %v873 = vmul.f32 %v866, %v872
    %vm874 = vcmp.eq.f32.partialorder %v866, inf
    %v875 = vsel %vm874, %v866, %v873
    %vm876 = vcmp.eq.f32.partialorder %v866, 0.0
    %v877 = vand.u32 %v866, 2147483648
    %v878 = vsel %vm876, %v877, %v875
    %v879 = vmax.f32 %v878, 1e-12
    %v880 = vrcp.pop %v879
    %v881 = vmul.f32 %v879, %v880
    %v882 = vsub.f32 1.0, %v881
    %v883 = vmul.f32 %v880, %v882
    %v884 = vadd.f32 %v880, %v883
    %vm885 = vweird.f32 %v879
    %vm886 = vweird.f32 %v880
    %vm887 = vmor %vm885, %vm886
    %v888 = vsel %vm887, %v880, %v884
    %v889 = vand.u32 2147483647, %v879
    %vm890 = vcmp.eq.f32.partialorder %v889, 8.507059e+37
    %v891 = vand.u32 %v879, 2147483648
    %v892 = vor.u32 1.1754944e-38, %v891
    %v893 = vsel %vm890, %v892, %v888
    %v894 = vmul.f32 1.0, %v893
    %v895 = vmul.f32 %v115, %v894
    %v896 = vmul.f32 %v858, %v191
    %897 = vxpose.xlu0.b32.start [1/16] %v896, 128
    %898 = vxpose.xlu0.b32.cont [2/16] 0.0, 128
    %899 = vxpose.xlu0.b32.cont [3/16] 0.0, 128
    %900 = vxpose.xlu0.b32.cont [4/16] 0.0, 128
    %901 = vxpose.xlu0.b32.cont [5/16] 0.0, 128
    %902 = vxpose.xlu0.b32.cont [6/16] 0.0, 128
    %903 = vxpose.xlu0.b32.cont [7/16] 0.0, 128
    %904 = vxpose.xlu0.b32.cont [8/16] 0.0, 128
    %905 = vxpose.xlu0.b32.cont [9/16] 0.0, 128
    %906 = vxpose.xlu0.b32.cont [10/16] 0.0, 128
    %907 = vxpose.xlu0.b32.cont [11/16] 0.0, 128
    %908 = vxpose.xlu0.b32.cont [12/16] 0.0, 128
    %909 = vxpose.xlu0.b32.cont [13/16] 0.0, 128
    %910 = vxpose.xlu0.b32.cont [14/16] 0.0, 128
    %911 = vxpose.xlu0.b32.cont [15/16] 0.0, 128
    %912 = vxpose.xlu0.b32.end [16/16] 0.0, 128
    %v913 = vpop.trf.xlu0
    %v914 = vpop.trf.xlu0
    %v915 = vpop.trf.xlu0
    %v916 = vpop.trf.xlu0
    %v917 = vpop.trf.xlu0
    %v918 = vpop.trf.xlu0
    %v919 = vpop.trf.xlu0
    %v920 = vpop.trf.xlu0
    %v921 = vpop.trf.xlu0
    %v922 = vpop.trf.xlu0
    %v923 = vpop.trf.xlu0
    %v924 = vpop.trf.xlu0
    %v925 = vpop.trf.xlu0
    %v926 = vpop.trf.xlu0
    %v927 = vpop.trf.xlu0
    %v928 = vpop.trf.xlu0
    %v930 = vsel %vm225, %v913, 0
    %v933 = vsel %vm225, %v914, 0
    %v936 = vsel %vm225, %v915, 0
    %v939 = vsel %vm225, %v916, 0
    %941 = vmatpush.msra.mxu0 0.0
    %942 = vmatpush.msra.mxu0 0.0
    %943 = vmatpush.msra.mxu0 0.0
    %944 = vmatpush.msra.mxu0 0.0
    %945 = vmatpush.msra.mxu0 0.0
    %946 = vmatpush.msra.mxu0 0.0
    %947 = vmatpush.msra.mxu0 0.0
    %948 = vmatpush.msra.mxu0 0.0
    %949 = vmatpush.msra.mxu0 0.0
    %950 = vmatpush.msra.mxu0 0.0
    %951 = vmatpush.msra.mxu0 0.0
    %952 = vmatpush.msra.mxu0 0.0
    %953 = vmatpush.msra.mxu0 0.0
    %954 = vmatpush.msra.mxu0 0.0
    %955 = vmatpush.msra.mxu0 0.0
    %956 = vmatpush.msra.mxu0 %v895
    %957 = vmatmul.f32.gmra.mxu0 %v930
    %v958 = vpop.f32.mrf.mxu0
    %v959 = vadd.f32 %v44, %v958
    %960 = vmatmul.f32.gmra.mxu0 %v933
    %v961 = vpop.f32.mrf.mxu0
    %v962 = vadd.f32 %v45, %v961
    %963 = vmatmul.f32.gmra.mxu0 %v936
    %v964 = vpop.f32.mrf.mxu0
    %v965 = vadd.f32 %v46, %v964
    %966 = vmatmul.f32.gmra.mxu0 %v939
    %v967 = vpop.f32.mrf.mxu0
    %v968 = vadd.f32 %v47, %v967
    %969 = vdwg.mxu0
    %v970 = vsel %vm57, %v959, -inf
    %971 = vmax.xlane.f32.xlu0 %v970
    %v972 = vpop.xlane.xlu0 %971
    %v973 = vsel %vm57, %v962, -inf
    %974 = vmax.xlane.f32.xlu0 %v973
    %v975 = vpop.xlane.xlu0 %974
    %v976 = vsel %vm57, %v965, -inf
    %977 = vmax.xlane.f32.xlu0 %v976
    %v978 = vpop.xlane.xlu0 %977
    %v979 = vsel %vm57, %v968, -inf
    %980 = vmax.xlane.f32.xlu0 %v979
    %v981 = vpop.xlane.xlu0 %980
    %v982 = vsub.f32 %v959, %v972
    %v983 = vsub.f32 %v962, %v975
    %v984 = vsub.f32 %v965, %v978
    %v985 = vsub.f32 %v968, %v981
    %v986 = vmul.f32 %v982, 1.442695
    %v987 = vpow.pop %v986
    %v988 = vmul.f32 %v983, 1.442695
    %v989 = vpow.pop %v988
    %v990 = vmul.f32 %v984, 1.442695
    %v991 = vpow.pop %v990
    %v992 = vmul.f32 %v985, 1.442695
    %v993 = vpow.pop %v992
    %v994 = vsel %vm57, %v987, 0.0
    %995 = vadd.xlane.f32.xlu0 %v994
    %v996 = vpop.xlane.xlu0 %995
    %v997 = vsel %vm57, %v989, 0.0
    %998 = vadd.xlane.f32.xlu0 %v997
    %v999 = vpop.xlane.xlu0 %998
    %v1000 = vsel %vm57, %v991, 0.0
    %1001 = vadd.xlane.f32.xlu0 %v1000
    %v1002 = vpop.xlane.xlu0 %1001
    %v1003 = vsel %vm57, %v993, 0.0
    %1004 = vadd.xlane.f32.xlu0 %v1003
    %v1005 = vpop.xlane.xlu0 %1004
    %v1006 = vrcp.pop %v996
    %v1007 = vmul.f32 %v996, %v1006
    %v1008 = vsub.f32 1.0, %v1007
    %v1009 = vmul.f32 %v1006, %v1008
    %v1010 = vadd.f32 %v1006, %v1009
    %vm1011 = vweird.f32 %v996
    %vm1012 = vweird.f32 %v1006
    %vm1013 = vmor %vm1011, %vm1012
    %v1014 = vsel %vm1013, %v1006, %v1010
    %v1015 = vand.u32 2147483647, %v996
    %vm1016 = vcmp.eq.f32.partialorder %v1015, 8.507059e+37
    %v1017 = vand.u32 %v996, 2147483648
    %v1018 = vor.u32 1.1754944e-38, %v1017
    %v1019 = vsel %vm1016, %v1018, %v1014
    %v1020 = vmul.f32 1.0, %v1019
    %v1021 = vrcp.pop %v999
    %v1022 = vmul.f32 %v999, %v1021
    %v1023 = vsub.f32 1.0, %v1022
    %v1024 = vmul.f32 %v1021, %v1023
    %v1025 = vadd.f32 %v1021, %v1024
    %vm1026 = vweird.f32 %v999
    %vm1027 = vweird.f32 %v1021
    %vm1028 = vmor %vm1026, %vm1027
    %v1029 = vsel %vm1028, %v1021, %v1025
    %v1030 = vand.u32 2147483647, %v999
    %vm1031 = vcmp.eq.f32.partialorder %v1030, 8.507059e+37
    %v1032 = vand.u32 %v999, 2147483648
    %v1033 = vor.u32 1.1754944e-38, %v1032
    %v1034 = vsel %vm1031, %v1033, %v1029
    %v1035 = vmul.f32 1.0, %v1034
    %v1036 = vrcp.pop %v1002
    %v1037 = vmul.f32 %v1002, %v1036
    %v1038 = vsub.f32 1.0, %v1037
    %v1039 = vmul.f32 %v1036, %v1038
    %v1040 = vadd.f32 %v1036, %v1039
    %vm1041 = vweird.f32 %v1002
    %vm1042 = vweird.f32 %v1036
    %vm1043 = vmor %vm1041, %vm1042
    %v1044 = vsel %vm1043, %v1036, %v1040
    %v1045 = vand.u32 2147483647, %v1002
    %vm1046 = vcmp.eq.f32.partialorder %v1045, 8.507059e+37
    %v1047 = vand.u32 %v1002, 2147483648
    %v1048 = vor.u32 1.1754944e-38, %v1047
    %v1049 = vsel %vm1046, %v1048, %v1044
    %v1050 = vmul.f32 1.0, %v1049
    %v1051 = vrcp.pop %v1005
    %v1052 = vmul.f32 %v1005, %v1051
    %v1053 = vsub.f32 1.0, %v1052
    %v1054 = vmul.f32 %v1051, %v1053
    %v1055 = vadd.f32 %v1051, %v1054
    %vm1056 = vweird.f32 %v1005
    %vm1057 = vweird.f32 %v1051
    %vm1058 = vmor %vm1056, %vm1057
    %v1059 = vsel %vm1058, %v1051, %v1055
    %v1060 = vand.u32 2147483647, %v1005
    %vm1061 = vcmp.eq.f32.partialorder %v1060, 8.507059e+37
    %v1062 = vand.u32 %v1005, 2147483648
    %v1063 = vor.u32 1.1754944e-38, %v1062
    %v1064 = vsel %vm1061, %v1063, %v1059
    %v1065 = vmul.f32 1.0, %v1064
    %v1066 = vmul.f32 %v987, %v1020
    %v1067 = vmul.f32 %v989, %v1035
    %v1068 = vmul.f32 %v991, %v1050
    %v1069 = vmul.f32 %v993, %v1065
    %1071 = vrot.lane.b32.xlu0 %v115, 96
    %v1072 = vpop.permute.xlu0 %1071
    %v1073 = vsel %vm57, %v1072, 0
    %v1076 = vsel %vm57, %v1066, 0
    %v1079 = vsel %vm57, %v1067, 0
    %v1082 = vsel %vm57, %v1068, 0
    %v1085 = vsel %vm57, %v1069, 0
    %1087 = vmatpush.xpose.msra.mxu0 0.0
    %1088 = vmatpush.xpose.msra.mxu0 0.0
    %1089 = vmatpush.xpose.msra.mxu0 0.0
    %1090 = vmatpush.xpose.msra.mxu0 0.0
    %1091 = vmatpush.xpose.msra.mxu0 0.0
    %1092 = vmatpush.xpose.msra.mxu0 0.0
    %1093 = vmatpush.xpose.msra.mxu0 0.0
    %1094 = vmatpush.xpose.msra.mxu0 0.0
    %1095 = vmatpush.xpose.msra.mxu0 0.0
    %1096 = vmatpush.xpose.msra.mxu0 0.0
    %1097 = vmatpush.xpose.msra.mxu0 0.0
    %1098 = vmatpush.xpose.msra.mxu0 0.0
    %1099 = vmatpush.xpose.msra.mxu0 %v1085
    %1100 = vmatpush.xpose.msra.mxu0 %v1082
    %1101 = vmatpush.xpose.msra.mxu0 %v1079
    %1102 = vmatpush.xpose.msra.mxu0 %v1076
    %1103 = vmatmul.f32.gmra.mxu0 %v1073
    %v1104 = vpop.f32.mrf.mxu0
    %v1105 = vadd.f32 0.0, %v1104
    %1106 = vdwg.mxu0
    %v1108 = vsel %vm57, %v1105, 0
    %1110 = vmatpush.msra.mxu0 0.0
    %1111 = vmatpush.msra.mxu0 0.0
    %1112 = vmatpush.msra.mxu0 0.0
    %1113 = vmatpush.msra.mxu0 0.0
    %1114 = vmatpush.msra.mxu0 0.0
    %1115 = vmatpush.msra.mxu0 0.0
    %1116 = vmatpush.msra.mxu0 0.0
    %1117 = vmatpush.msra.mxu0 0.0
    %1118 = vmatpush.msra.mxu0 0.0
    %1119 = vmatpush.msra.mxu0 0.0
    %1120 = vmatpush.msra.mxu0 0.0
    %1121 = vmatpush.msra.mxu0 0.0
    %1122 = vmatpush.msra.mxu0 %v42
    %1123 = vmatpush.msra.mxu0 %v41
    %1124 = vmatpush.msra.mxu0 %v40
    %1125 = vmatpush.msra.mxu0 %v39
    %1126 = vmatmul.f32.gmra.mxu0 %v1108
    %v1127 = vpop.f32.mrf.mxu0
    %v1128 = vadd.f32 %v404, %v1127
    %1129 = vdwg.mxu0
    %v1131 = vsel %vm57, %v895, %v1072
    %1132 = vxpose.xlu0.b32.start [1/16] %v1131, 128
    %1133 = vxpose.xlu0.b32.cont [2/16] 0.0, 128
    %1134 = vxpose.xlu0.b32.cont [3/16] 0.0, 128
    %1135 = vxpose.xlu0.b32.cont [4/16] 0.0, 128
    %1136 = vxpose.xlu0.b32.cont [5/16] 0.0, 128
    %1137 = vxpose.xlu0.b32.cont [6/16] 0.0, 128
    %1138 = vxpose.xlu0.b32.cont [7/16] 0.0, 128
    %1139 = vxpose.xlu0.b32.cont [8/16] 0.0, 128
    %1140 = vxpose.xlu0.b32.cont [9/16] 0.0, 128
    %1141 = vxpose.xlu0.b32.cont [10/16] 0.0, 128
    %1142 = vxpose.xlu0.b32.cont [11/16] 0.0, 128
    %1143 = vxpose.xlu0.b32.cont [12/16] 0.0, 128
    %1144 = vxpose.xlu0.b32.cont [13/16] 0.0, 128
    %1145 = vxpose.xlu0.b32.cont [14/16] 0.0, 128
    %1146 = vxpose.xlu0.b32.cont [15/16] 0.0, 128
    %1147 = vxpose.xlu0.b32.end [16/16] 0.0, 128
    %v1148 = vpop.trf.xlu0
    %v1149 = vpop.trf.xlu0
    %v1150 = vpop.trf.xlu0
    %v1151 = vpop.trf.xlu0
    %v1152 = vpop.trf.xlu0
    %v1153 = vpop.trf.xlu0
    %v1154 = vpop.trf.xlu0
    %v1155 = vpop.trf.xlu0
    %v1156 = vpop.trf.xlu0
    %v1157 = vpop.trf.xlu0
    %v1158 = vpop.trf.xlu0
    %v1159 = vpop.trf.xlu0
    %v1160 = vpop.trf.xlu0
    %v1161 = vpop.trf.xlu0
    %v1162 = vpop.trf.xlu0
    %v1163 = vpop.trf.xlu0
    %v1165 = vsel %vm225, %v1148, 0
    %v1168 = vsel %vm225, %v1149, 0
    %v1171 = vsel %vm225, %v1150, 0
    %v1174 = vsel %vm225, %v1151, 0
    %v1177 = vsel %vm225, %v1152, 0
    %v1180 = vsel %vm225, %v1153, 0
    %v1183 = vsel %vm225, %v1154, 0
    %v1186 = vsel %vm225, %v1155, 0
    %1188 = vmatpush.msra.mxu0 0.0
    %1189 = vmatpush.msra.mxu0 0.0
    %1190 = vmatpush.msra.mxu0 0.0
    %1191 = vmatpush.msra.mxu0 0.0
    %1192 = vmatpush.msra.mxu0 0.0
    %1193 = vmatpush.msra.mxu0 0.0
    %1194 = vmatpush.msra.mxu0 0.0
    %1195 = vmatpush.msra.mxu0 0.0
    %1196 = vmatpush.msra.mxu0 0.0
    %1197 = vmatpush.msra.mxu0 0.0
    %1198 = vmatpush.msra.mxu0 0.0
    %1199 = vmatpush.msra.mxu0 0.0
    %1200 = vmatpush.msra.mxu0 0.0
    %1201 = vmatpush.msra.mxu0 0.0
    %1202 = vmatpush.msra.mxu0 0.0
    %1203 = vmatpush.msra.mxu0 %v430
    %1204 = vmatmul.f32.gmra.mxu0 %v1165
    %v1205 = vpop.f32.mrf.mxu0
    %v1206 = vadd.f32 %v431, %v1205
    %1207 = vmatmul.f32.gmra.mxu0 %v1168
    %v1208 = vpop.f32.mrf.mxu0
    %v1209 = vadd.f32 %v431, %v1208
    %1210 = vmatmul.f32.gmra.mxu0 %v1171
    %v1211 = vpop.f32.mrf.mxu0
    %v1212 = vadd.f32 %v431, %v1211
    %1213 = vmatmul.f32.gmra.mxu0 %v1174
    %v1214 = vpop.f32.mrf.mxu0
    %v1215 = vadd.f32 %v431, %v1214
    %1216 = vmatmul.f32.gmra.mxu0 %v1177
    %v1217 = vpop.f32.mrf.mxu0
    %v1218 = vadd.f32 %v431, %v1217
    %1219 = vmatmul.f32.gmra.mxu0 %v1180
    %v1220 = vpop.f32.mrf.mxu0
    %v1221 = vadd.f32 %v431, %v1220
    %1222 = vmatmul.f32.gmra.mxu0 %v1183
    %v1223 = vpop.f32.mrf.mxu0
    %v1224 = vadd.f32 %v431, %v1223
    %1225 = vmatmul.f32.gmra.mxu0 %v1186
    %v1226 = vpop.f32.mrf.mxu0
    %v1227 = vadd.f32 %v431, %v1226
    %1228 = vdwg.mxu0
    %v1229 = vmul.f32 %v858, %v529
    %v1230 = vmul.f32 %v1229, %v48
    %v1231 = vmul.f32 %v1229, %v49
    %v1232 = vmul.f32 %v1229, %v50
    %v1233 = vmul.f32 %v1229, %v51
    %v1235 = vsel %vm57, %v1230, 0
    %v1238 = vsel %vm57, %v1231, 0
    %v1241 = vsel %vm57, %v1232, 0
    %v1244 = vsel %vm57, %v1233, 0
    %1246 = vmatpush.msra.mxu0 0.0
    %1247 = vmatpush.msra.mxu0 0.0
    %1248 = vmatpush.msra.mxu0 0.0
    %1249 = vmatpush.msra.mxu0 0.0
    %1250 = vmatpush.msra.mxu0 0.0
    %1251 = vmatpush.msra.mxu0 0.0
    %1252 = vmatpush.msra.mxu0 0.0
    %1253 = vmatpush.msra.mxu0 0.0
    %1254 = vmatpush.msra.mxu0 0.0
    %1255 = vmatpush.msra.mxu0 0.0
    %1256 = vmatpush.msra.mxu0 0.0
    %1257 = vmatpush.msra.mxu0 0.0
    %1258 = vmatpush.msra.mxu0 %v1215
    %1259 = vmatpush.msra.mxu0 %v1212
    %1260 = vmatpush.msra.mxu0 %v1209
    %1261 = vmatpush.msra.mxu0 %v1206
    %1262 = vmatmul.f32.gmra.mxu0 %v1235
    %v1263 = vpop.f32.mrf.mxu0
    %v1264 = vadd.f32 0.0, %v1263
    %1265 = vmatmul.f32.gmra.mxu0 %v1238
    %v1266 = vpop.f32.mrf.mxu0
    %v1267 = vadd.f32 0.0, %v1266
    %1268 = vmatmul.f32.gmra.mxu0 %v1241
    %v1269 = vpop.f32.mrf.mxu0
    %v1270 = vadd.f32 0.0, %v1269
    %1271 = vmatmul.f32.gmra.mxu0 %v1244
    %v1272 = vpop.f32.mrf.mxu0
    %v1273 = vadd.f32 0.0, %v1272
    %1274 = vdwg.mxu0
    %v1275 = vsel %vm576, %v1264, -inf
    %1276 = vmax.xlane.f32.xlu0 %v1275
    %v1277 = vpop.xlane.xlu0 %1276
    %v1278 = vsel %vm576, %v1267, -inf
    %1279 = vmax.xlane.f32.xlu0 %v1278
    %v1280 = vpop.xlane.xlu0 %1279
    %v1281 = vsel %vm576, %v1270, -inf
    %1282 = vmax.xlane.f32.xlu0 %v1281
    %v1283 = vpop.xlane.xlu0 %1282
    %v1284 = vsel %vm576, %v1273, -inf
    %1285 = vmax.xlane.f32.xlu0 %v1284
    %v1286 = vpop.xlane.xlu0 %1285
    %v1287 = vsub.f32 %v1264, %v1277
    %v1288 = vsub.f32 %v1267, %v1280
    %v1289 = vsub.f32 %v1270, %v1283
    %v1290 = vsub.f32 %v1273, %v1286
    %v1291 = vmul.f32 %v1287, 1.442695
    %v1292 = vpow.pop %v1291
    %v1293 = vmul.f32 %v1288, 1.442695
    %v1294 = vpow.pop %v1293
    %v1295 = vmul.f32 %v1289, 1.442695
    %v1296 = vpow.pop %v1295
    %v1297 = vmul.f32 %v1290, 1.442695
    %v1298 = vpow.pop %v1297
    %v1299 = vsel %vm576, %v1292, 0.0
    %1300 = vadd.xlane.f32.xlu0 %v1299
    %v1301 = vpop.xlane.xlu0 %1300
    %v1302 = vsel %vm576, %v1294, 0.0
    %1303 = vadd.xlane.f32.xlu0 %v1302
    %v1304 = vpop.xlane.xlu0 %1303
    %v1305 = vsel %vm576, %v1296, 0.0
    %1306 = vadd.xlane.f32.xlu0 %v1305
    %v1307 = vpop.xlane.xlu0 %1306
    %v1308 = vsel %vm576, %v1298, 0.0
    %1309 = vadd.xlane.f32.xlu0 %v1308
    %v1310 = vpop.xlane.xlu0 %1309
    %v1311 = vrcp.pop %v1301
    %v1312 = vmul.f32 %v1301, %v1311
    %v1313 = vsub.f32 1.0, %v1312
    %v1314 = vmul.f32 %v1311, %v1313
    %v1315 = vadd.f32 %v1311, %v1314
    %vm1316 = vweird.f32 %v1301
    %vm1317 = vweird.f32 %v1311
    %vm1318 = vmor %vm1316, %vm1317
    %v1319 = vsel %vm1318, %v1311, %v1315
    %v1320 = vand.u32 2147483647, %v1301
    %vm1321 = vcmp.eq.f32.partialorder %v1320, 8.507059e+37
    %v1322 = vand.u32 %v1301, 2147483648
    %v1323 = vor.u32 1.1754944e-38, %v1322
    %v1324 = vsel %vm1321, %v1323, %v1319
    %v1325 = vmul.f32 1.0, %v1324
    %v1326 = vrcp.pop %v1304
    %v1327 = vmul.f32 %v1304, %v1326
    %v1328 = vsub.f32 1.0, %v1327
    %v1329 = vmul.f32 %v1326, %v1328
    %v1330 = vadd.f32 %v1326, %v1329
    %vm1331 = vweird.f32 %v1304
    %vm1332 = vweird.f32 %v1326
    %vm1333 = vmor %vm1331, %vm1332
    %v1334 = vsel %vm1333, %v1326, %v1330
    %v1335 = vand.u32 2147483647, %v1304
    %vm1336 = vcmp.eq.f32.partialorder %v1335, 8.507059e+37
    %v1337 = vand.u32 %v1304, 2147483648
    %v1338 = vor.u32 1.1754944e-38, %v1337
    %v1339 = vsel %vm1336, %v1338, %v1334
    %v1340 = vmul.f32 1.0, %v1339
    %v1341 = vrcp.pop %v1307
    %v1342 = vmul.f32 %v1307, %v1341
    %v1343 = vsub.f32 1.0, %v1342
    %v1344 = vmul.f32 %v1341, %v1343
    %v1345 = vadd.f32 %v1341, %v1344
    %vm1346 = vweird.f32 %v1307
    %vm1347 = vweird.f32 %v1341
    %vm1348 = vmor %vm1346, %vm1347
    %v1349 = vsel %vm1348, %v1341, %v1345
    %v1350 = vand.u32 2147483647, %v1307
    %vm1351 = vcmp.eq.f32.partialorder %v1350, 8.507059e+37
    %v1352 = vand.u32 %v1307, 2147483648
    %v1353 = vor.u32 1.1754944e-38, %v1352
    %v1354 = vsel %vm1351, %v1353, %v1349
    %v1355 = vmul.f32 1.0, %v1354
    %v1356 = vrcp.pop %v1310
    %v1357 = vmul.f32 %v1310, %v1356
    %v1358 = vsub.f32 1.0, %v1357
    %v1359 = vmul.f32 %v1356, %v1358
    %v1360 = vadd.f32 %v1356, %v1359
    %vm1361 = vweird.f32 %v1310
    %vm1362 = vweird.f32 %v1356
    %vm1363 = vmor %vm1361, %vm1362
    %v1364 = vsel %vm1363, %v1356, %v1360
    %v1365 = vand.u32 2147483647, %v1310
    %vm1366 = vcmp.eq.f32.partialorder %v1365, 8.507059e+37
    %v1367 = vand.u32 %v1310, 2147483648
    %v1368 = vor.u32 1.1754944e-38, %v1367
    %v1369 = vsel %vm1366, %v1368, %v1364
    %v1370 = vmul.f32 1.0, %v1369
    %v1371 = vmul.f32 %v1292, %v1325
    %v1372 = vmul.f32 %v1294, %v1340
    %v1373 = vmul.f32 %v1296, %v1355
    %v1374 = vmul.f32 %v1298, %v1370
    %v1376 = vsel %vm576, %v1371, 0
    %v1379 = vsel %vm576, %v1372, 0
    %v1382 = vsel %vm576, %v1373, 0
    %v1385 = vsel %vm576, %v1374, 0
    %v1388 = vsel %vm576, %v1218, 0
    %v1391 = vsel %vm576, %v1221, 0
    %v1394 = vsel %vm576, %v1224, 0
    %v1397 = vsel %vm576, %v1227, 0
    %1399 = vmatpush.xpose.msra.mxu0 0.0
    %1400 = vmatpush.xpose.msra.mxu0 0.0
    %1401 = vmatpush.xpose.msra.mxu0 0.0
    %1402 = vmatpush.xpose.msra.mxu0 0.0
    %1403 = vmatpush.xpose.msra.mxu0 0.0
    %1404 = vmatpush.xpose.msra.mxu0 0.0
    %1405 = vmatpush.xpose.msra.mxu0 0.0
    %1406 = vmatpush.xpose.msra.mxu0 0.0
    %1407 = vmatpush.xpose.msra.mxu0 0.0
    %1408 = vmatpush.xpose.msra.mxu0 0.0
    %1409 = vmatpush.xpose.msra.mxu0 0.0
    %1410 = vmatpush.xpose.msra.mxu0 0.0
    %1411 = vmatpush.xpose.msra.mxu0 %v1397
    %1412 = vmatpush.xpose.msra.mxu0 %v1394
    %1413 = vmatpush.xpose.msra.mxu0 %v1391
    %1414 = vmatpush.xpose.msra.mxu0 %v1388
    %1415 = vmatmul.f32.gmra.mxu0 %v1376
    %v1416 = vpop.f32.mrf.mxu0
    %v1417 = vadd.f32 0.0, %v1416
    %1418 = vmatmul.f32.gmra.mxu0 %v1379
    %v1419 = vpop.f32.mrf.mxu0
    %v1420 = vadd.f32 0.0, %v1419
    %1421 = vmatmul.f32.gmra.mxu0 %v1382
    %v1422 = vpop.f32.mrf.mxu0
    %v1423 = vadd.f32 0.0, %v1422
    %1424 = vmatmul.f32.gmra.mxu0 %v1385
    %v1425 = vpop.f32.mrf.mxu0
    %v1426 = vadd.f32 0.0, %v1425
    %1427 = vdwg.mxu0
    %v1428 = vmul.f32 %v1417, %v48
    %v1429 = vmul.f32 %v1420, %v49
    %v1430 = vmul.f32 %v1423, %v50
    %v1431 = vmul.f32 %v1426, %v51
    %1432 = vxpose.xlu0.b32.start [1/16] %v1428, 128
    %1433 = vxpose.xlu0.b32.cont [2/16] %v1429, 128
    %1434 = vxpose.xlu0.b32.cont [3/16] %v1430, 128
    %1435 = vxpose.xlu0.b32.cont [4/16] %v1431, 128
    %1436 = vxpose.xlu0.b32.cont [5/16] 0.0, 128
    %1437 = vxpose.xlu0.b32.cont [6/16] 0.0, 128
    %1438 = vxpose.xlu0.b32.cont [7/16] 0.0, 128
    %1439 = vxpose.xlu0.b32.cont [8/16] 0.0, 128
    %1440 = vxpose.xlu0.b32.cont [9/16] 0.0, 128
    %1441 = vxpose.xlu0.b32.cont [10/16] 0.0, 128
    %1442 = vxpose.xlu0.b32.cont [11/16] 0.0, 128
    %1443 = vxpose.xlu0.b32.cont [12/16] 0.0, 128
    %1444 = vxpose.xlu0.b32.cont [13/16] 0.0, 128
    %1445 = vxpose.xlu0.b32.cont [14/16] 0.0, 128
    %1446 = vxpose.xlu0.b32.cont [15/16] 0.0, 128
    %1447 = vxpose.xlu0.b32.end [16/16] 0.0, 128
    %v1448 = vpop.trf.xlu0
    %v1449 = vpop.trf.xlu0
    %v1450 = vpop.trf.xlu0
    %v1451 = vpop.trf.xlu0
    %v1452 = vpop.trf.xlu0
    %v1453 = vpop.trf.xlu0
    %v1454 = vpop.trf.xlu0
    %v1455 = vpop.trf.xlu0
    %v1456 = vpop.trf.xlu0
    %v1457 = vpop.trf.xlu0
    %v1458 = vpop.trf.xlu0
    %v1459 = vpop.trf.xlu0
    %v1460 = vpop.trf.xlu0
    %v1461 = vpop.trf.xlu0
    %v1462 = vpop.trf.xlu0
    %v1463 = vpop.trf.xlu0
    %v1465 = vsel %vm57, %v1448, 0
    %v1468 = vsel %vm57, %v1449, 0
    %v1471 = vsel %vm57, %v1450, 0
    %v1474 = vsel %vm57, %v1451, 0
    %1476 = vmatpush.msra.mxu0 0.0
    %1477 = vmatpush.msra.mxu0 0.0
    %1478 = vmatpush.msra.mxu0 0.0
    %1479 = vmatpush.msra.mxu0 0.0
    %1480 = vmatpush.msra.mxu0 0.0
    %1481 = vmatpush.msra.mxu0 0.0
    %1482 = vmatpush.msra.mxu0 0.0
    %1483 = vmatpush.msra.mxu0 0.0
    %1484 = vmatpush.msra.mxu0 0.0
    %1485 = vmatpush.msra.mxu0 0.0
    %1486 = vmatpush.msra.mxu0 0.0
    %1487 = vmatpush.msra.mxu0 0.0
    %1488 = vmatpush.msra.mxu0 %v38
    %1489 = vmatpush.msra.mxu0 %v37
    %1490 = vmatpush.msra.mxu0 %v36
    %1491 = vmatpush.msra.mxu0 %v35
    %1492 = vmatmul.f32.gmra.mxu0 %v1465
    %v1493 = vpop.f32.mrf.mxu0
    %v1494 = vadd.f32 0.0, %v1493
    %1495 = vmatmul.f32.gmra.mxu0 %v1468
    %v1496 = vpop.f32.mrf.mxu0
    %v1497 = vadd.f32 0.0, %v1496
    %1498 = vmatmul.f32.gmra.mxu0 %v1471
    %v1499 = vpop.f32.mrf.mxu0
    %v1500 = vadd.f32 0.0, %v1499
    %1501 = vmatmul.f32.gmra.mxu0 %v1474
    %v1502 = vpop.f32.mrf.mxu0
    %v1503 = vadd.f32 0.0, %v1502
    %1504 = vdwg.mxu0
    %v1505 = vsel %vm807, %v1494, 0.0
    %v1506 = vsel %vm807, %v1497, 0.0
    %v1507 = vadd.f32 %v1505, %v1506
    %v1508 = vsel %vm807, %v1500, 0.0
    %v1509 = vadd.f32 %v1507, %v1508
    %v1510 = vsel %vm807, %v1503, 0.0
    %v1511 = vadd.f32 %v1509, %v1510
    %v1512 = vadd.f32 %v1511, %v815
    %1514 = vrot.lane.b32.xlu0 %v1128, 16
    %v1515 = vpop.permute.xlu0 %1514
    %v1517 = vsel %vm807, %v1512, %v1515
    %1518 = vst.msk [vmem:[#allocation2] sm:$0xff] %vm57, %v821
    %1519 = vst.msk [vmem:[#allocation2 + $0x8] sm:$0xff] %vm57, %v1517
    // Predicated region
    $region30: #{tpu_custom_call.1} parent=1 // pred_check
      _
    $region31: #{tpu_custom_call.1} parent=1 // pred_check_branch
      %1521 = sbr.rel (0) target = $region33
    $region32: #{tpu_custom_call.1} parent=1 // pred_region
      %1523 = vsyncadd [#allocation3], 0
      %s1524 = sshll.u32 [#allocation2], 4
      %s1525 = int_to_ptr.vmem [resolvable:$true] %s1524
      %s1526 = sshll.u32 %s7, 4
      %s1527 = int_to_ptr.hbm [resolvable:$true] %s1526
      %1532 = dma.vmem_to_hbm [thread:$0]  %s1525, 256, %s1527, [#allocation3], 128, 128, 8
    $region33: #{tpu_custom_call.1} parent=1 // pred_fallthru
      _
    // Predicated region
    $region34: #{tpu_custom_call.1} parent=1 // pred_check
      _
    $region35: #{tpu_custom_call.1} parent=1 // pred_check_branch
      %1534 = sbr.rel (0) target = $region37
    $region36: #{tpu_custom_call.1} parent=1 // pred_region
      %1536 = dma.done [#allocation3], 256
    $region37: #{tpu_custom_call.1} parent=1 // pred_fallthru
      _
    %1537 = vsyncpa [#allocation3], 1

</llo_original>
